<compile_context>
chip_gen: v6e
topology: v6e:2x2x1
jax: 0.10.0
libtpu: 0.0.40
codegen_flags: <defaults>
</compile_context>

<pallas_src>
import jax
import jax.numpy as jnp
from jax import lax
from jax.experimental import pallas as pl
from jax.experimental.pallas import tpu as pltpu


def _round_up(x, m):
    return ((x + m - 1) // m) * m


def _largest_divisor_leq(n, cap):
    for d in range(min(n, cap), 0, -1):
        if n % d == 0:
            return d
    return 1


# ----------------------------------------------------------------------------
# Kernel A: batched input projection gx = x @ Wx_i2h + b_i2h  (non-recurrent).
# ----------------------------------------------------------------------------
def gate_x_kernel(x_ref, wxh_ref, bh_ref, gx_ref):
    gx_ref[...] = (
        jnp.dot(x_ref[...], wxh_ref[...], preferred_element_type=jnp.float32)
        + bh_ref[...]
    ).astype(gx_ref.dtype)


# ----------------------------------------------------------------------------
# Kernel B: the serial recurrence. grid=(T/Tc,), hidden carried in VMEM.
#   Per step only  h @ Whh + gx_t  + gate activations, plus the i2o
#   contribution of the pre-update hidden (h_{t-1} @ Who).
# ----------------------------------------------------------------------------
def lstm_recurrent_kernel(gx_ref, h0_ref, whh_ref, who_ref,
                          oh_ref, hlast_ref, h_carry):
    c = pl.program_id(0)
    Tc = gx_ref.shape[0]
    Hp = h_carry.shape[1]                     # lane-aligned hidden width

    @pl.when(c == 0)
    def _():
        h_carry[...] = h0_ref[...].astype(jnp.float32)

    def step(i, h):
        # i2o uses "combined" = [x_t, h_{t-1}], i.e. the pre-update hidden.
        oh_ref[i] = jnp.dot(h, who_ref[...],
                            preferred_element_type=jnp.float32).astype(oh_ref.dtype)
        g = jnp.dot(h, whh_ref[...], preferred_element_type=jnp.float32) + gx_ref[i]
        h_cand = jnp.tanh(g[:, 0 * Hp:1 * Hp])
        ig = jax.nn.sigmoid(g[:, 1 * Hp:2 * Hp])
        fg = jax.nn.sigmoid(g[:, 2 * Hp:3 * Hp])
        og = jax.nn.sigmoid(g[:, 3 * Hp:4 * Hp])
        cell = fg * h + ig * h_cand           # recomputed from h (matches module)
        return og * jnp.tanh(cell)

    h_new = lax.fori_loop(0, Tc, step, h_carry[...], unroll=True)
    h_carry[...] = h_new

    @pl.when(c == pl.num_programs(0) - 1)
    def _():
        hlast_ref[...] = h_new.astype(hlast_ref.dtype)


# ----------------------------------------------------------------------------
# Kernel C: logits = x @ Wxo + oh + b, then log_softmax.  Lane-dense output
#   (O padded to 128; pad logits carry a ~-inf bias so softmax ignores them).
# ----------------------------------------------------------------------------
def i2o_logsoftmax_kernel(x_ref, oh_ref, wxo_ref, bo_ref, out_ref):
    logits = (jnp.dot(x_ref[...], wxo_ref[...], preferred_element_type=jnp.float32)
              + oh_ref[...] + bo_ref[...])
    m = jnp.max(logits, axis=1, keepdims=True)
    z = logits - m
    lse = jnp.log(jnp.sum(jnp.exp(z), axis=1, keepdims=True))
    out_ref[...] = (z - lse).astype(out_ref.dtype)


# ----------------------------------------------------------------------------
# Wrapper: one-time weight split/transpose/pad, then three pallas_calls.
# ----------------------------------------------------------------------------
def lstm_forward_sequence(x_seq, h0, w_i2h, b_i2h, w_i2o, b_i2o):
    """Run the whole sequence.

    x_seq:  (T, B, input_size)
    h0:     (B, hidden_size)                            initial hidden
    w_i2h:  (4*hidden_size, input_size + hidden_size)   [PyTorch Linear layout]
    b_i2h:  (4*hidden_size,)
    w_i2o:  (output_size, input_size + hidden_size)
    b_i2o:  (output_size,)
    returns: (outputs (T, B, output_size) log-softmax per step,
              final hidden (B, hidden_size))
    """
    T, B, In = x_seq.shape
    H = h0.shape[1]
    O = w_i2o.shape[0]
    Hp = _round_up(H, 128)                    # lane-aligned gate / hidden width
    Op = _round_up(O, 128)                    # lane-dense output width
    Bp = _round_up(B, 8)                      # sublane-aligned batch
    dtype = x_seq.dtype
    NEG = jnp.float32(-1e30)                  # "-inf" for pad logits

    Tc = _largest_divisor_leq(T, 16)          # timesteps per grid step
    n_chunks = T // Tc

    # --- one-time weight prep (hoisted out of the per-timestep path) --------
    w_xh = w_i2h[:, :In].T                    # (In, 4H)
    w_hh = w_i2h[:, In:].T                    # (H, 4H)
    w_xo = w_i2o[:, :In].T                    # (In, O)
    w_ho = w_i2o[:, In:].T                    # (H, O)

    def pad_gate_cols(w):                     # (R, 4H) -> (R, 4*Hp), zero pad per gate
        r = w.shape[0]
        w = w.reshape(r, 4, H)
        w = jnp.pad(w, ((0, 0), (0, 0), (0, Hp - H)))
        return w.reshape(r, 4 * Hp)

    w_xh_p = pad_gate_cols(w_xh)                                      # (In, 4Hp)
    w_hh_p = jnp.pad(pad_gate_cols(w_hh), ((0, Hp - H), (0, 0)))      # (Hp, 4Hp)
    b_h_p = pad_gate_cols(b_i2h.reshape(1, 4 * H))                    # (1, 4Hp)
    w_xo_p = jnp.pad(w_xo, ((0, 0), (0, Op - O)))                     # (In, Op)
    w_ho_p = jnp.pad(w_ho, ((0, Hp - H), (0, Op - O)))                # (Hp, Op)
    b_o_p = jnp.concatenate(                                          # (1, Op)
        [b_i2o.astype(jnp.float32), jnp.full((Op - O,), NEG, jnp.float32)]
    ).reshape(1, Op)
    h0_p = jnp.pad(h0, ((0, Bp - B), (0, Hp - H)))                    # (Bp, Hp)

    # --- batch-pad x and flatten for the batched (non-recurrent) GEMMs ------
    x_p = jnp.pad(x_seq, ((0, 0), (0, Bp - B), (0, 0)))               # (T, Bp, In)
    rows = T * Bp
    x_flat = x_p.reshape(rows, In)
    R = min(512, rows)                         # row tile (multiple of 8)
    rows_pad = _round_up(rows, R)
    x_flat_p = jnp.pad(x_flat, ((0, rows_pad - rows), (0, 0)))

    # --- kernel A: hoisted input projection ----------------------------------
    gx_flat = pl.pallas_call(
        gate_x_kernel,
        out_shape=jax.ShapeDtypeStruct((rows_pad, 4 * Hp), jnp.float32),
        grid=(rows_pad // R,),
        in_specs=[
            pl.BlockSpec((R, In), lambda r: (r, 0)),
            pl.BlockSpec((In, 4 * Hp), lambda r: (0, 0)),
            pl.BlockSpec((1, 4 * Hp), lambda r: (0, 0)),
        ],
        out_specs=pl.BlockSpec((R, 4 * Hp), lambda r: (r, 0)),
        compiler_params=pltpu.CompilerParams(dimension_semantics=("parallel",)),
    )(x_flat_p, w_xh_p, b_h_p)
    gx_all = gx_flat[:rows].reshape(T, Bp, 4 * Hp)

    # --- kernel B: serial recurrence, Tc timesteps per grid step -------------
    seq_grid = pltpu.PrefetchScalarGridSpec(
        num_scalar_prefetch=0,
        grid=(n_chunks,),
        in_specs=[
            pl.BlockSpec((Tc, Bp, 4 * Hp), lambda c: (c, 0, 0)),   # gx chunk
            pl.BlockSpec((Bp, Hp), lambda c: (0, 0)),              # h0      (DMA once)
            pl.BlockSpec((Hp, 4 * Hp), lambda c: (0, 0)),          # Wh_i2h  (DMA once)
            pl.BlockSpec((Hp, Op), lambda c: (0, 0)),              # Wh_i2o  (DMA once)
        ],
        out_specs=[
            pl.BlockSpec((Tc, Bp, Op), lambda c: (c, 0, 0)),       # oh per step
            pl.BlockSpec((Bp, Hp), lambda c: (0, 0)),              # final hidden
        ],
        scratch_shapes=[pltpu.VMEM((Bp, Hp), jnp.float32)],        # hidden carry
    )
    oh_all, h_last = pl.pallas_call(
        lstm_recurrent_kernel,
        out_shape=(
            jax.ShapeDtypeStruct((T, Bp, Op), jnp.float32),
            jax.ShapeDtypeStruct((Bp, Hp), dtype),
        ),
        grid_spec=seq_grid,
        compiler_params=pltpu.CompilerParams(
            dimension_semantics=("arbitrary",),                    # serial recurrence
            vmem_limit_bytes=32 * 1024 * 1024),
        # TODO(synk): at production widths, single-buffer the constant-index
        # weight specs (pipeline_mode=pl.Buffered(1)) and cast them to bf16
        # so Whh fits v7x's 64 MiB VMEM.
    )(gx_all, h0_p, w_hh_p, w_ho_p)

    # --- kernel C: i2o (x part) + oh + bias, then log_softmax ---------------
    oh_flat = jnp.pad(oh_all.reshape(rows, Op), ((0, rows_pad - rows), (0, 0)))
    out_flat = pl.pallas_call(
        i2o_logsoftmax_kernel,
        out_shape=jax.ShapeDtypeStruct((rows_pad, Op), dtype),
        grid=(rows_pad // R,),
        in_specs=[
            pl.BlockSpec((R, In), lambda r: (r, 0)),
            pl.BlockSpec((R, Op), lambda r: (r, 0)),
            pl.BlockSpec((In, Op), lambda r: (0, 0)),
            pl.BlockSpec((1, Op), lambda r: (0, 0)),
        ],
        out_specs=pl.BlockSpec((R, Op), lambda r: (r, 0)),
        compiler_params=pltpu.CompilerParams(dimension_semantics=("parallel",)),
    )(x_flat_p, oh_flat, w_xo_p, b_o_p)

    outputs = out_flat[:rows].reshape(T, Bp, Op)[:, :B, :O]
    return outputs, h_last[:B, :H]


# ----------------------------------------------------------------------------
# Parameter init + pure-JAX reference
# ----------------------------------------------------------------------------
def init_params(key, input_size, hidden_size, output_size, dtype=jnp.float32):
    """nn.Linear-style U(-1/sqrt(fan_in), 1/sqrt(fan_in)) init."""
    k1, k2, k3, k4 = jax.random.split(key, 4)
    fan_in = input_size + hidden_size
    bound = 1.0 / jnp.sqrt(fan_in)
    gate = 4 * hidden_size
    w_i2h = jax.random.uniform(k1, (gate, fan_in), dtype, -bound, bound)
    b_i2h = jax.random.uniform(k2, (gate,), dtype, -bound, bound)
    w_i2o = jax.random.uniform(k3, (output_size, fan_in), dtype, -bound, bound)
    b_i2o = jax.random.uniform(k4, (output_size,), dtype, -bound, bound)
    return w_i2h, b_i2h, w_i2o, b_i2o


def reference_forward(x, hidden, w_i2h, b_i2h, w_i2o, b_i2o, hidden_size):
    """Pure-JAX single-step reference (mirrors the PyTorch module)."""
    combined = jnp.concatenate([x, hidden], axis=1)
    g = combined @ w_i2h.T + b_i2h
    h_cand = jnp.tanh(g[:, :hidden_size])
    ig = jax.nn.sigmoid(g[:, hidden_size:2 * hidden_size])
    fg = jax.nn.sigmoid(g[:, 2 * hidden_size:3 * hidden_size])
    og = jax.nn.sigmoid(g[:, 3 * hidden_size:4 * hidden_size])
    new_hidden = og * jnp.tanh(fg * hidden + ig * h_cand)
    out = jax.nn.log_softmax(combined @ w_i2o.T + b_i2o, axis=1)
    return out, new_hidden


if __name__ == "__main__":
    key = jax.random.PRNGKey(0)
    kx, kp = jax.random.split(key, 2)

    batch = 2
    input_size = 16
    hidden_size = 32
    output_size = 8
    seq_len = 4

    params = init_params(kp, input_size, hidden_size, output_size)
    line = jax.random.normal(kx, (seq_len, batch, input_size), jnp.float32)
    h0 = jnp.zeros((batch, hidden_size), jnp.float32)        # initHidden (batched)

    fwd = jax.jit(lstm_forward_sequence)
    outputs, h_final = fwd(line, h0, *params)
    outputs = jax.block_until_ready(outputs)
    h_final = jax.block_until_ready(h_final)

    # Reference: step-by-step, like the PyTorch train/test loop.
    h_ref = h0
    outs_ref = []
    for t in range(seq_len):
        o_ref, h_ref = reference_forward(line[t], h_ref, *params, hidden_size)
        outs_ref.append(o_ref)
    outs_ref = jnp.stack(outs_ref)

    assert jnp.allclose(outputs, outs_ref, atol=1e-4, rtol=1e-4), "output mismatch"
    assert jnp.allclose(h_final, h_ref, atol=1e-4, rtol=1e-4), "hidden mismatch"

    print("KERNEL_OK")
</pallas_src>

<mosaic_0001>
module attributes {stable_mosaic.version = 11 : i64} {
  func.func @gate_x_kernel(%arg0: i32, %arg1: memref<32x16xf32, #tpu.memory_space<vmem>>, %arg2: memref<16x512xf32, #tpu.memory_space<vmem>>, %arg3: memref<1x512xf32, #tpu.memory_space<vmem>>, %arg4: memref<32x512xf32, #tpu.memory_space<vmem>>) attributes {dimension_semantics = [#tpu.dimension_semantics<parallel>], iteration_bounds = array<i64: 1>, scalar_prefetch = 0 : i64, scratch_operands = 0 : i64, tpu.core_type = #tpu.core_type<tc>, window_params = [{transform_indices = @transform_0, window_bounds = array<i64: 32, 16>}, {pipeline_mode = #tpu.pipeline_mode<synchronous>, transform_indices = @transform_1, window_bounds = array<i64: 16, 512>}, {pipeline_mode = #tpu.pipeline_mode<synchronous>, transform_indices = @transform_2, window_bounds = array<i64: 1, 512>}, {transform_indices = @transform_3, window_bounds = array<i64: 32, 512>}]} {
    %c0 = arith.constant 0 : index
    %c0_0 = arith.constant 0 : index
    %0 = vector.load %arg1[%c0, %c0_0] : memref<32x16xf32, #tpu.memory_space<vmem>>, vector<32x16xf32>
    %c0_1 = arith.constant 0 : index
    %c0_2 = arith.constant 0 : index
    %1 = vector.load %arg2[%c0_1, %c0_2] : memref<16x512xf32, #tpu.memory_space<vmem>>, vector<16x512xf32>
    %cst = arith.constant dense<0.000000e+00> : vector<32x512xf32>
    %2 = tpu.matmul %0, %1, %cst {dimension_numbers = #tpu.dot_dimension_numbers<[1], [0], [0], [1], [0, 0, 1, 1], [], []>} : vector<32x16xf32>, vector<16x512xf32>, vector<32x512xf32> -> vector<32x512xf32>
    %c0_3 = arith.constant 0 : index
    %c0_4 = arith.constant 0 : index
    %3 = vector.load %arg3[%c0_3, %c0_4] : memref<1x512xf32, #tpu.memory_space<vmem>>, vector<1x512xf32>
    %4 = vector.broadcast %3 : vector<1x512xf32> to vector<32x512xf32>
    %5 = arith.addf %2, %4 : vector<32x512xf32>
    %c0_5 = arith.constant 0 : index
    %c0_6 = arith.constant 0 : index
    %6 = vector.load %arg4[%c0_5, %c0_6] : memref<32x512xf32, #tpu.memory_space<vmem>>, vector<32x512xf32>
    tpu.vector_store %arg4[%c0_5, %c0_6], %5 {strides = array<i32>} : memref<32x512xf32, #tpu.memory_space<vmem>>, vector<32x512xf32>,
    return
  }
  func.func @transform_0(%arg0: i32) -> (i32, i32) {
    %c0_i32 = arith.constant 0 : i32
    %c0_i32_0 = arith.constant 0 : i32
    return %arg0, %c0_i32 : i32, i32
  }
  func.func @transform_1(%arg0: i32) -> (i32, i32) {
    %c0_i32 = arith.constant 0 : i32
    %c0_i32_0 = arith.constant 0 : i32
    %c0_i32_1 = arith.constant 0 : i32
    return %c0_i32, %c0_i32_0 : i32, i32
  }
  func.func @transform_2(%arg0: i32) -> (i32, i32) {
    %c0_i32 = arith.constant 0 : i32
    %c0_i32_0 = arith.constant 0 : i32
    %c0_i32_1 = arith.constant 0 : i32
    return %c0_i32, %c0_i32_0 : i32, i32
  }
  func.func @transform_3(%arg0: i32) -> (i32, i32) {
    %c0_i32 = arith.constant 0 : i32
    %c0_i32_0 = arith.constant 0 : i32
    return %arg0, %c0_i32 : i32, i32
  }
}

module attributes {stable_mosaic.version = 11 : i64} {
  func.func @i2o_logsoftmax_kernel(%arg0: i32, %arg1: memref<32x16xf32, #tpu.memory_space<vmem>>, %arg2: memref<32x128xf32, #tpu.memory_space<vmem>>, %arg3: memref<16x128xf32, #tpu.memory_space<vmem>>, %arg4: memref<1x128xf32, #tpu.memory_space<vmem>>, %arg5: memref<32x128xf32, #tpu.memory_space<vmem>>) attributes {dimension_semantics = [#tpu.dimension_semantics<parallel>], iteration_bounds = array<i64: 1>, scalar_prefetch = 0 : i64, scratch_operands = 0 : i64, tpu.core_type = #tpu.core_type<tc>, window_params = [{transform_indices = @transform_0, window_bounds = array<i64: 32, 16>}, {transform_indices = @transform_1, window_bounds = array<i64: 32, 128>}, {pipeline_mode = #tpu.pipeline_mode<synchronous>, transform_indices = @transform_2, window_bounds = array<i64: 16, 128>}, {pipeline_mode = #tpu.pipeline_mode<synchronous>, transform_indices = @transform_3, window_bounds = array<i64: 1, 128>}, {transform_indices = @transform_4, window_bounds = array<i64: 32, 128>}]} {
    %c0 = arith.constant 0 : index
    %c0_0 = arith.constant 0 : index
    %0 = vector.load %arg1[%c0, %c0_0] : memref<32x16xf32, #tpu.memory_space<vmem>>, vector<32x16xf32>
    %c0_1 = arith.constant 0 : index
    %c0_2 = arith.constant 0 : index
    %1 = vector.load %arg3[%c0_1, %c0_2] : memref<16x128xf32, #tpu.memory_space<vmem>>, vector<16x128xf32>
    %cst = arith.constant dense<0.000000e+00> : vector<32x128xf32>
    %2 = tpu.matmul %0, %1, %cst {dimension_numbers = #tpu.dot_dimension_numbers<[1], [0], [0], [1], [0, 0, 1, 1], [], []>} : vector<32x16xf32>, vector<16x128xf32>, vector<32x128xf32> -> vector<32x128xf32>
    %c0_3 = arith.constant 0 : index
    %c0_4 = arith.constant 0 : index
    %3 = vector.load %arg2[%c0_3, %c0_4] : memref<32x128xf32, #tpu.memory_space<vmem>>, vector<32x128xf32>
    %4 = arith.addf %2, %3 : vector<32x128xf32>
    %c0_5 = arith.constant 0 : index
    %c0_6 = arith.constant 0 : index
    %5 = vector.load %arg4[%c0_5, %c0_6] : memref<1x128xf32, #tpu.memory_space<vmem>>, vector<1x128xf32>
    %6 = vector.broadcast %5 : vector<1x128xf32> to vector<32x128xf32>
    %7 = arith.addf %4, %6 : vector<32x128xf32>
    %cst_7 = arith.constant dense<0xFF800000> : vector<32xf32>
    %8 = vector.multi_reduction <maximumf>, %7, %cst_7 [1] : vector<32x128xf32> to vector<32xf32>
    %9 = vector.shape_cast %8 : vector<32xf32> to vector<32x1xf32>
    %10 = vector.broadcast %9 : vector<32x1xf32> to vector<32x128xf32>
    %11 = arith.subf %7, %10 : vector<32x128xf32>
    %12 = math.exp %11 : vector<32x128xf32>
    %cst_8 = arith.constant dense<0.000000e+00> : vector<32xf32>
    %13 = vector.multi_reduction <add>, %12, %cst_8 [1] : vector<32x128xf32> to vector<32xf32>
    %14 = vector.shape_cast %13 : vector<32xf32> to vector<32x1xf32>
    %15 = math.log %14 : vector<32x1xf32>
    %16 = vector.broadcast %15 : vector<32x1xf32> to vector<32x128xf32>
    %17 = arith.subf %11, %16 : vector<32x128xf32>
    %c0_9 = arith.constant 0 : index
    %c0_10 = arith.constant 0 : index
    %18 = vector.load %arg5[%c0_9, %c0_10] : memref<32x128xf32, #tpu.memory_space<vmem>>, vector<32x128xf32>
    tpu.vector_store %arg5[%c0_9, %c0_10], %17 {strides = array<i32>} : memref<32x128xf32, #tpu.memory_space<vmem>>, vector<32x128xf32>,
    return
  }
  func.func @transform_0(%arg0: i32) -> (i32, i32) {
    %c0_i32 = arith.constant 0 : i32
    %c0_i32_0 = arith.constant 0 : i32
    return %arg0, %c0_i32 : i32, i32
  }
  func.func @transform_1(%arg0: i32) -> (i32, i32) {
    %c0_i32 = arith.constant 0 : i32
    %c0_i32_0 = arith.constant 0 : i32
    return %arg0, %c0_i32 : i32, i32
  }
  func.func @transform_2(%arg0: i32) -> (i32, i32) {
    %c0_i32 = arith.constant 0 : i32
    %c0_i32_0 = arith.constant 0 : i32
    %c0_i32_1 = arith.constant 0 : i32
    return %c0_i32, %c0_i32_0 : i32, i32
  }
  func.func @transform_3(%arg0: i32) -> (i32, i32) {
    %c0_i32 = arith.constant 0 : i32
    %c0_i32_0 = arith.constant 0 : i32
    %c0_i32_1 = arith.constant 0 : i32
    return %c0_i32, %c0_i32_0 : i32, i32
  }
  func.func @transform_4(%arg0: i32) -> (i32, i32) {
    %c0_i32 = arith.constant 0 : i32
    %c0_i32_0 = arith.constant 0 : i32
    return %arg0, %c0_i32 : i32, i32
  }
}

module attributes {stable_mosaic.version = 11 : i64} {
  func.func @lstm_recurrent_kernel(%arg0: i32, %arg1: memref<4x8x512xf32, #tpu.memory_space<vmem>>, %arg2: memref<8x128xf32, #tpu.memory_space<vmem>>, %arg3: memref<128x512xf32, #tpu.memory_space<vmem>>, %arg4: memref<128x128xf32, #tpu.memory_space<vmem>>, %arg5: memref<4x8x128xf32, #tpu.memory_space<vmem>>, %arg6: memref<8x128xf32, #tpu.memory_space<vmem>>, %arg7: memref<8x128xf32, #tpu.memory_space<vmem>>) attributes {dimension_semantics = [#tpu.dimension_semantics<arbitrary>], iteration_bounds = array<i64: 1>, scalar_prefetch = 0 : i64, scratch_operands = 1 : i64, tpu.core_type = #tpu.core_type<tc>, window_params = [{transform_indices = @transform_0, window_bounds = array<i64: 4, 8, 512>}, {pipeline_mode = #tpu.pipeline_mode<synchronous>, transform_indices = @transform_1, window_bounds = array<i64: 8, 128>}, {pipeline_mode = #tpu.pipeline_mode<synchronous>, transform_indices = @transform_2, window_bounds = array<i64: 128, 512>}, {pipeline_mode = #tpu.pipeline_mode<synchronous>, transform_indices = @transform_3, window_bounds = array<i64: 128, 128>}, {transform_indices = @transform_4, window_bounds = array<i64: 4, 8, 128>}, {pipeline_mode = #tpu.pipeline_mode<synchronous>, transform_indices = @transform_5, window_bounds = array<i64: 8, 128>}]} {
    %c0_i32 = arith.constant 0 : i32
    %0 = arith.cmpi eq, %arg0, %c0_i32 : i32
    %1 = arith.extui %0 : i1 to i32
    %c0_i32_0 = arith.constant 0 : i32
    %2 = arith.cmpi ne, %1, %c0_i32_0 : i32
    scf.if %2 {
      %c0_58 = arith.constant 0 : index
      %c0_59 = arith.constant 0 : index
      %156 = vector.load %arg2[%c0_58, %c0_59] : memref<8x128xf32, #tpu.memory_space<vmem>>, vector<8x128xf32>
      %c0_60 = arith.constant 0 : index
      %c0_61 = arith.constant 0 : index
      %157 = vector.load %arg7[%c0_60, %c0_61] : memref<8x128xf32, #tpu.memory_space<vmem>>, vector<8x128xf32>
      tpu.vector_store %arg7[%c0_60, %c0_61], %156 {strides = array<i32>} : memref<8x128xf32, #tpu.memory_space<vmem>>, vector<8x128xf32>,
    } else {
    }
    %c0 = arith.constant 0 : index
    %c0_1 = arith.constant 0 : index
    %3 = vector.load %arg7[%c0, %c0_1] : memref<8x128xf32, #tpu.memory_space<vmem>>, vector<8x128xf32>
    %c0_i32_2 = arith.constant 0 : i32
    %c0_3 = arith.constant 0 : index
    %c0_4 = arith.constant 0 : index
    %4 = vector.load %arg4[%c0_3, %c0_4] : memref<128x128xf32, #tpu.memory_space<vmem>>, vector<128x128xf32>
    %cst = arith.constant dense<0.000000e+00> : vector<8x128xf32>
    %5 = tpu.matmul %3, %4, %cst {dimension_numbers = #tpu.dot_dimension_numbers<[1], [0], [0], [1], [0, 0, 1, 1], [], []>} : vector<8x128xf32>, vector<128x128xf32>, vector<8x128xf32> -> vector<8x128xf32>
    %6 = arith.index_cast %c0_i32_2 : i32 to index
    %c0_5 = arith.constant 0 : index
    %c0_6 = arith.constant 0 : index
    %7 = vector.load %arg5[%6, %c0_5, %c0_6] : memref<4x8x128xf32, #tpu.memory_space<vmem>>, vector<1x8x128xf32>
    %8 = vector.shape_cast %7 : vector<1x8x128xf32> to vector<8x128xf32>
    %9 = vector.shape_cast %5 : vector<8x128xf32> to vector<1x8x128xf32>
    tpu.vector_store %arg5[%6, %c0_5, %c0_6], %9 {strides = array<i32>} : memref<4x8x128xf32, #tpu.memory_space<vmem>>, vector<1x8x128xf32>,
    %c0_7 = arith.constant 0 : index
    %c0_8 = arith.constant 0 : index
    %10 = vector.load %arg3[%c0_7, %c0_8] : memref<128x512xf32, #tpu.memory_space<vmem>>, vector<128x512xf32>
    %cst_9 = arith.constant dense<0.000000e+00> : vector<8x512xf32>
    %11 = tpu.matmul %3, %10, %cst_9 {dimension_numbers = #tpu.dot_dimension_numbers<[1], [0], [0], [1], [0, 0, 1, 1], [], []>} : vector<8x128xf32>, vector<128x512xf32>, vector<8x512xf32> -> vector<8x512xf32>
    %12 = arith.index_cast %c0_i32_2 : i32 to index
    %c0_10 = arith.constant 0 : index
    %c0_11 = arith.constant 0 : index
    %13 = vector.load %arg1[%12, %c0_10, %c0_11] : memref<4x8x512xf32, #tpu.memory_space<vmem>>, vector<1x8x512xf32>
    %14 = vector.shape_cast %13 : vector<1x8x512xf32> to vector<8x512xf32>
    %15 = arith.addf %11, %14 : vector<8x512xf32>
    %16 = vector.extract_strided_slice %15 {offsets = [0, 0], sizes = [8, 128], strides = [1, 1]} : vector<8x512xf32> to vector<8x128xf32>
    %17 = math.tanh %16 : vector<8x128xf32>
    %18 = vector.extract_strided_slice %15 {offsets = [0, 128], sizes = [8, 128], strides = [1, 1]} : vector<8x512xf32> to vector<8x128xf32>
    %19 = arith.negf %18 : vector<8x128xf32>
    %20 = math.exp %19 : vector<8x128xf32>
    %cst_12 = arith.constant 1.000000e+00 : f32
    %21 = vector.broadcast %cst_12 : f32 to vector<8x128xf32>
    %22 = arith.addf %21, %20 : vector<8x128xf32>
    %23 = arith.divf %21, %22 : vector<8x128xf32>
    %24 = vector.extract_strided_slice %15 {offsets = [0, 256], sizes = [8, 128], strides = [1, 1]} : vector<8x512xf32> to vector<8x128xf32>
    %25 = arith.negf %24 : vector<8x128xf32>
    %26 = math.exp %25 : vector<8x128xf32>
    %cst_13 = arith.constant 1.000000e+00 : f32
    %27 = vector.broadcast %cst_13 : f32 to vector<8x128xf32>
    %28 = arith.addf %27, %26 : vector<8x128xf32>
    %29 = arith.divf %27, %28 : vector<8x128xf32>
    %30 = vector.extract_strided_slice %15 {offsets = [0, 384], sizes = [8, 128], strides = [1, 1]} : vector<8x512xf32> to vector<8x128xf32>
    %31 = arith.negf %30 : vector<8x128xf32>
    %32 = math.exp %31 : vector<8x128xf32>
    %cst_14 = arith.constant 1.000000e+00 : f32
    %33 = vector.broadcast %cst_14 : f32 to vector<8x128xf32>
    %34 = arith.addf %33, %32 : vector<8x128xf32>
    %35 = arith.divf %33, %34 : vector<8x128xf32>
    %36 = arith.mulf %29, %3 : vector<8x128xf32>
    %37 = arith.mulf %23, %17 : vector<8x128xf32>
    %38 = arith.addf %36, %37 : vector<8x128xf32>
    %39 = math.tanh %38 : vector<8x128xf32>
    %40 = arith.mulf %35, %39 : vector<8x128xf32>
    %c1_i32 = arith.constant 1 : i32
    %c0_15 = arith.constant 0 : index
    %c0_16 = arith.constant 0 : index
    %41 = vector.load %arg4[%c0_15, %c0_16] : memref<128x128xf32, #tpu.memory_space<vmem>>, vector<128x128xf32>
    %cst_17 = arith.constant dense<0.000000e+00> : vector<8x128xf32>
    %42 = tpu.matmul %40, %41, %cst_17 {dimension_numbers = #tpu.dot_dimension_numbers<[1], [0], [0], [1], [0, 0, 1, 1], [], []>} : vector<8x128xf32>, vector<128x128xf32>, vector<8x128xf32> -> vector<8x128xf32>
    %43 = arith.index_cast %c1_i32 : i32 to index
    %c0_18 = arith.constant 0 : index
    %c0_19 = arith.constant 0 : index
    %44 = vector.load %arg5[%43, %c0_18, %c0_19] : memref<4x8x128xf32, #tpu.memory_space<vmem>>, vector<1x8x128xf32>
    %45 = vector.shape_cast %44 : vector<1x8x128xf32> to vector<8x128xf32>
    %46 = vector.shape_cast %42 : vector<8x128xf32> to vector<1x8x128xf32>
    tpu.vector_store %arg5[%43, %c0_18, %c0_19], %46 {strides = array<i32>} : memref<4x8x128xf32, #tpu.memory_space<vmem>>, vector<1x8x128xf32>,
    %c0_20 = arith.constant 0 : index
    %c0_21 = arith.constant 0 : index
    %47 = vector.load %arg3[%c0_20, %c0_21] : memref<128x512xf32, #tpu.memory_space<vmem>>, vector<128x512xf32>
    %cst_22 = arith.constant dense<0.000000e+00> : vector<8x512xf32>
    %48 = tpu.matmul %40, %47, %cst_22 {dimension_numbers = #tpu.dot_dimension_numbers<[1], [0], [0], [1], [0, 0, 1, 1], [], []>} : vector<8x128xf32>, vector<128x512xf32>, vector<8x512xf32> -> vector<8x512xf32>
    %49 = arith.index_cast %c1_i32 : i32 to index
    %c0_23 = arith.constant 0 : index
    %c0_24 = arith.constant 0 : index
    %50 = vector.load %arg1[%49, %c0_23, %c0_24] : memref<4x8x512xf32, #tpu.memory_space<vmem>>, vector<1x8x512xf32>
    %51 = vector.shape_cast %50 : vector<1x8x512xf32> to vector<8x512xf32>
    %52 = arith.addf %48, %51 : vector<8x512xf32>
    %53 = vector.extract_strided_slice %52 {offsets = [0, 0], sizes = [8, 128], strides = [1, 1]} : vector<8x512xf32> to vector<8x128xf32>
    %54 = math.tanh %53 : vector<8x128xf32>
    %55 = vector.extract_strided_slice %52 {offsets = [0, 128], sizes = [8, 128], strides = [1, 1]} : vector<8x512xf32> to vector<8x128xf32>
    %56 = arith.negf %55 : vector<8x128xf32>
    %57 = math.exp %56 : vector<8x128xf32>
    %cst_25 = arith.constant 1.000000e+00 : f32
    %58 = vector.broadcast %cst_25 : f32 to vector<8x128xf32>
    %59 = arith.addf %58, %57 : vector<8x128xf32>
    %60 = arith.divf %58, %59 : vector<8x128xf32>
    %61 = vector.extract_strided_slice %52 {offsets = [0, 256], sizes = [8, 128], strides = [1, 1]} : vector<8x512xf32> to vector<8x128xf32>
    %62 = arith.negf %61 : vector<8x128xf32>
    %63 = math.exp %62 : vector<8x128xf32>
    %cst_26 = arith.constant 1.000000e+00 : f32
    %64 = vector.broadcast %cst_26 : f32 to vector<8x128xf32>
    %65 = arith.addf %64, %63 : vector<8x128xf32>
    %66 = arith.divf %64, %65 : vector<8x128xf32>
    %67 = vector.extract_strided_slice %52 {offsets = [0, 384], sizes = [8, 128], strides = [1, 1]} : vector<8x512xf32> to vector<8x128xf32>
    %68 = arith.negf %67 : vector<8x128xf32>
    %69 = math.exp %68 : vector<8x128xf32>
    %cst_27 = arith.constant 1.000000e+00 : f32
    %70 = vector.broadcast %cst_27 : f32 to vector<8x128xf32>
    %71 = arith.addf %70, %69 : vector<8x128xf32>
    %72 = arith.divf %70, %71 : vector<8x128xf32>
    %73 = arith.mulf %66, %40 : vector<8x128xf32>
    %74 = arith.mulf %60, %54 : vector<8x128xf32>
    %75 = arith.addf %73, %74 : vector<8x128xf32>
    %76 = math.tanh %75 : vector<8x128xf32>
    %77 = arith.mulf %72, %76 : vector<8x128xf32>
    %c2_i32 = arith.constant 2 : i32
    %c0_28 = arith.constant 0 : index
    %c0_29 = arith.constant 0 : index
    %78 = vector.load %arg4[%c0_28, %c0_29] : memref<128x128xf32, #tpu.memory_space<vmem>>, vector<128x128xf32>
    %cst_30 = arith.constant dense<0.000000e+00> : vector<8x128xf32>
    %79 = tpu.matmul %77, %78, %cst_30 {dimension_numbers = #tpu.dot_dimension_numbers<[1], [0], [0], [1], [0, 0, 1, 1], [], []>} : vector<8x128xf32>, vector<128x128xf32>, vector<8x128xf32> -> vector<8x128xf32>
    %80 = arith.index_cast %c2_i32 : i32 to index
    %c0_31 = arith.constant 0 : index
    %c0_32 = arith.constant 0 : index
    %81 = vector.load %arg5[%80, %c0_31, %c0_32] : memref<4x8x128xf32, #tpu.memory_space<vmem>>, vector<1x8x128xf32>
    %82 = vector.shape_cast %81 : vector<1x8x128xf32> to vector<8x128xf32>
    %83 = vector.shape_cast %79 : vector<8x128xf32> to vector<1x8x128xf32>
    tpu.vector_store %arg5[%80, %c0_31, %c0_32], %83 {strides = array<i32>} : memref<4x8x128xf32, #tpu.memory_space<vmem>>, vector<1x8x128xf32>,
    %c0_33 = arith.constant 0 : index
    %c0_34 = arith.constant 0 : index
    %84 = vector.load %arg3[%c0_33, %c0_34] : memref<128x512xf32, #tpu.memory_space<vmem>>, vector<128x512xf32>
    %cst_35 = arith.constant dense<0.000000e+00> : vector<8x512xf32>
    %85 = tpu.matmul %77, %84, %cst_35 {dimension_numbers = #tpu.dot_dimension_numbers<[1], [0], [0], [1], [0, 0, 1, 1], [], []>} : vector<8x128xf32>, vector<128x512xf32>, vector<8x512xf32> -> vector<8x512xf32>
    %86 = arith.index_cast %c2_i32 : i32 to index
    %c0_36 = arith.constant 0 : index
    %c0_37 = arith.constant 0 : index
    %87 = vector.load %arg1[%86, %c0_36, %c0_37] : memref<4x8x512xf32, #tpu.memory_space<vmem>>, vector<1x8x512xf32>
    %88 = vector.shape_cast %87 : vector<1x8x512xf32> to vector<8x512xf32>
    %89 = arith.addf %85, %88 : vector<8x512xf32>
    %90 = vector.extract_strided_slice %89 {offsets = [0, 0], sizes = [8, 128], strides = [1, 1]} : vector<8x512xf32> to vector<8x128xf32>
    %91 = math.tanh %90 : vector<8x128xf32>
    %92 = vector.extract_strided_slice %89 {offsets = [0, 128], sizes = [8, 128], strides = [1, 1]} : vector<8x512xf32> to vector<8x128xf32>
    %93 = arith.negf %92 : vector<8x128xf32>
    %94 = math.exp %93 : vector<8x128xf32>
    %cst_38 = arith.constant 1.000000e+00 : f32
    %95 = vector.broadcast %cst_38 : f32 to vector<8x128xf32>
    %96 = arith.addf %95, %94 : vector<8x128xf32>
    %97 = arith.divf %95, %96 : vector<8x128xf32>
    %98 = vector.extract_strided_slice %89 {offsets = [0, 256], sizes = [8, 128], strides = [1, 1]} : vector<8x512xf32> to vector<8x128xf32>
    %99 = arith.negf %98 : vector<8x128xf32>
    %100 = math.exp %99 : vector<8x128xf32>
    %cst_39 = arith.constant 1.000000e+00 : f32
    %101 = vector.broadcast %cst_39 : f32 to vector<8x128xf32>
    %102 = arith.addf %101, %100 : vector<8x128xf32>
    %103 = arith.divf %101, %102 : vector<8x128xf32>
    %104 = vector.extract_strided_slice %89 {offsets = [0, 384], sizes = [8, 128], strides = [1, 1]} : vector<8x512xf32> to vector<8x128xf32>
    %105 = arith.negf %104 : vector<8x128xf32>
    %106 = math.exp %105 : vector<8x128xf32>
    %cst_40 = arith.constant 1.000000e+00 : f32
    %107 = vector.broadcast %cst_40 : f32 to vector<8x128xf32>
    %108 = arith.addf %107, %106 : vector<8x128xf32>
    %109 = arith.divf %107, %108 : vector<8x128xf32>
    %110 = arith.mulf %103, %77 : vector<8x128xf32>
    %111 = arith.mulf %97, %91 : vector<8x128xf32>
    %112 = arith.addf %110, %111 : vector<8x128xf32>
    %113 = math.tanh %112 : vector<8x128xf32>
    %114 = arith.mulf %109, %113 : vector<8x128xf32>
    %c3_i32 = arith.constant 3 : i32
    %c0_41 = arith.constant 0 : index
    %c0_42 = arith.constant 0 : index
    %115 = vector.load %arg4[%c0_41, %c0_42] : memref<128x128xf32, #tpu.memory_space<vmem>>, vector<128x128xf32>
    %cst_43 = arith.constant dense<0.000000e+00> : vector<8x128xf32>
    %116 = tpu.matmul %114, %115, %cst_43 {dimension_numbers = #tpu.dot_dimension_numbers<[1], [0], [0], [1], [0, 0, 1, 1], [], []>} : vector<8x128xf32>, vector<128x128xf32>, vector<8x128xf32> -> vector<8x128xf32>
    %117 = arith.index_cast %c3_i32 : i32 to index
    %c0_44 = arith.constant 0 : index
    %c0_45 = arith.constant 0 : index
    %118 = vector.load %arg5[%117, %c0_44, %c0_45] : memref<4x8x128xf32, #tpu.memory_space<vmem>>, vector<1x8x128xf32>
    %119 = vector.shape_cast %118 : vector<1x8x128xf32> to vector<8x128xf32>
    %120 = vector.shape_cast %116 : vector<8x128xf32> to vector<1x8x128xf32>
    tpu.vector_store %arg5[%117, %c0_44, %c0_45], %120 {strides = array<i32>} : memref<4x8x128xf32, #tpu.memory_space<vmem>>, vector<1x8x128xf32>,
    %c0_46 = arith.constant 0 : index
    %c0_47 = arith.constant 0 : index
    %121 = vector.load %arg3[%c0_46, %c0_47] : memref<128x512xf32, #tpu.memory_space<vmem>>, vector<128x512xf32>
    %cst_48 = arith.constant dense<0.000000e+00> : vector<8x512xf32>
    %122 = tpu.matmul %114, %121, %cst_48 {dimension_numbers = #tpu.dot_dimension_numbers<[1], [0], [0], [1], [0, 0, 1, 1], [], []>} : vector<8x128xf32>, vector<128x512xf32>, vector<8x512xf32> -> vector<8x512xf32>
    %123 = arith.index_cast %c3_i32 : i32 to index
    %c0_49 = arith.constant 0 : index
    %c0_50 = arith.constant 0 : index
    %124 = vector.load %arg1[%123, %c0_49, %c0_50] : memref<4x8x512xf32, #tpu.memory_space<vmem>>, vector<1x8x512xf32>
    %125 = vector.shape_cast %124 : vector<1x8x512xf32> to vector<8x512xf32>
    %126 = arith.addf %122, %125 : vector<8x512xf32>
    %127 = vector.extract_strided_slice %126 {offsets = [0, 0], sizes = [8, 128], strides = [1, 1]} : vector<8x512xf32> to vector<8x128xf32>
    %128 = math.tanh %127 : vector<8x128xf32>
    %129 = vector.extract_strided_slice %126 {offsets = [0, 128], sizes = [8, 128], strides = [1, 1]} : vector<8x512xf32> to vector<8x128xf32>
    %130 = arith.negf %129 : vector<8x128xf32>
    %131 = math.exp %130 : vector<8x128xf32>
    %cst_51 = arith.constant 1.000000e+00 : f32
    %132 = vector.broadcast %cst_51 : f32 to vector<8x128xf32>
    %133 = arith.addf %132, %131 : vector<8x128xf32>
    %134 = arith.divf %132, %133 : vector<8x128xf32>
    %135 = vector.extract_strided_slice %126 {offsets = [0, 256], sizes = [8, 128], strides = [1, 1]} : vector<8x512xf32> to vector<8x128xf32>
    %136 = arith.negf %135 : vector<8x128xf32>
    %137 = math.exp %136 : vector<8x128xf32>
    %cst_52 = arith.constant 1.000000e+00 : f32
    %138 = vector.broadcast %cst_52 : f32 to vector<8x128xf32>
    %139 = arith.addf %138, %137 : vector<8x128xf32>
    %140 = arith.divf %138, %139 : vector<8x128xf32>
    %141 = vector.extract_strided_slice %126 {offsets = [0, 384], sizes = [8, 128], strides = [1, 1]} : vector<8x512xf32> to vector<8x128xf32>
    %142 = arith.negf %141 : vector<8x128xf32>
    %143 = math.exp %142 : vector<8x128xf32>
    %cst_53 = arith.constant 1.000000e+00 : f32
    %144 = vector.broadcast %cst_53 : f32 to vector<8x128xf32>
    %145 = arith.addf %144, %143 : vector<8x128xf32>
    %146 = arith.divf %144, %145 : vector<8x128xf32>
    %147 = arith.mulf %140, %114 : vector<8x128xf32>
    %148 = arith.mulf %134, %128 : vector<8x128xf32>
    %149 = arith.addf %147, %148 : vector<8x128xf32>
    %150 = math.tanh %149 : vector<8x128xf32>
    %151 = arith.mulf %146, %150 : vector<8x128xf32>
    %c4_i32 = arith.constant 4 : i32
    %c0_54 = arith.constant 0 : index
    %c0_55 = arith.constant 0 : index
    %152 = vector.load %arg7[%c0_54, %c0_55] : memref<8x128xf32, #tpu.memory_space<vmem>>, vector<8x128xf32>
    tpu.vector_store %arg7[%c0_54, %c0_55], %151 {strides = array<i32>} : memref<8x128xf32, #tpu.memory_space<vmem>>, vector<8x128xf32>,
    %c0_i32_56 = arith.constant 0 : i32
    %153 = arith.cmpi eq, %arg0, %c0_i32_56 : i32
    %154 = arith.extui %153 : i1 to i32
    %c0_i32_57 = arith.constant 0 : i32
    %155 = arith.cmpi ne, %154, %c0_i32_57 : i32
    scf.if %155 {
      %c0_58 = arith.constant 0 : index
      %c0_59 = arith.constant 0 : index
      %156 = vector.load %arg6[%c0_58, %c0_59] : memref<8x128xf32, #tpu.memory_space<vmem>>, vector<8x128xf32>
      tpu.vector_store %arg6[%c0_58, %c0_59], %151 {strides = array<i32>} : memref<8x128xf32, #tpu.memory_space<vmem>>, vector<8x128xf32>,
    } else {
    }
    return
  }
  func.func @transform_0(%arg0: i32) -> (i32, i32, i32) {
    %c0_i32 = arith.constant 0 : i32
    %c0_i32_0 = arith.constant 0 : i32
    %c0_i32_1 = arith.constant 0 : i32
    return %arg0, %c0_i32, %c0_i32_0 : i32, i32, i32
  }
  func.func @transform_1(%arg0: i32) -> (i32, i32) {
    %c0_i32 = arith.constant 0 : i32
    %c0_i32_0 = arith.constant 0 : i32
    %c0_i32_1 = arith.constant 0 : i32
    return %c0_i32, %c0_i32_0 : i32, i32
  }
  func.func @transform_2(%arg0: i32) -> (i32, i32) {
    %c0_i32 = arith.constant 0 : i32
    %c0_i32_0 = arith.constant 0 : i32
    %c0_i32_1 = arith.constant 0 : i32
    return %c0_i32, %c0_i32_0 : i32, i32
  }
  func.func @transform_3(%arg0: i32) -> (i32, i32) {
    %c0_i32 = arith.constant 0 : i32
    %c0_i32_0 = arith.constant 0 : i32
    %c0_i32_1 = arith.constant 0 : i32
    return %c0_i32, %c0_i32_0 : i32, i32
  }
  func.func @transform_4(%arg0: i32) -> (i32, i32, i32) {
    %c0_i32 = arith.constant 0 : i32
    %c0_i32_0 = arith.constant 0 : i32
    %c0_i32_1 = arith.constant 0 : i32
    return %arg0, %c0_i32, %c0_i32_0 : i32, i32, i32
  }
  func.func @transform_5(%arg0: i32) -> (i32, i32) {
    %c0_i32 = arith.constant 0 : i32
    %c0_i32_0 = arith.constant 0 : i32
    %c0_i32_1 = arith.constant 0 : i32
    return %c0_i32, %c0_i32_0 : i32, i32
  }
}

</mosaic_0001>

<llo_original>
// kernel: lstm_forward_sequence.3
$region0: #{lstm_forward_sequence.3}
  #allocation0 [shape = 'u32[]', space=smem, size = 0x4, offset = 0x4, fixed_abs, tag = 'smem constant byte address 0x4 - core index']
  #allocation1 [shape = 'u32[144,128]{1,0:T(1,128)}', space=vmem, size = 0x12000, scoped, tag = 'internal scratch']
  %s0 = inlined_call_operand.vmem [shape: f32[32,16], index: 0, kind: input, shape index: {}]
  %s1 = inlined_call_operand.vmem [shape: f32[16,512], index: 1, kind: input, shape index: {}]
  %s2 = inlined_call_operand.vmem [shape: f32[1,512], index: 2, kind: input, shape index: {}]
  %s3 = inlined_call_operand.vmem [shape: f32[32,512], index: 3, kind: output, shape index: {}]
  %s4 = sld [smem:[#allocation0]]
  $region22: #{lstm_forward_sequence.3} parent=0
    _
  %s6 = ssub.s32 1, %s4
  %s7 = scalar_select 0, %s6, %s4
  // Predicated region
  $region2: #{lstm_forward_sequence.3} parent=0 // pred_check
    _
  $region3: #{lstm_forward_sequence.3} parent=0 // pred_check_branch
    %9 = sbr.rel (0) target = $region5
  $region4: #{lstm_forward_sequence.3} parent=0 // pred_region
    _
  $region5: #{lstm_forward_sequence.3} parent=0 // pred_fallthru
    _
  // Predicated region
  $region6: #{lstm_forward_sequence.3} parent=0 // pred_check
    _
  $region7: #{lstm_forward_sequence.3} parent=0 // pred_check_branch
    %11 = sbr.rel (0) target = $region9
  $region8: #{lstm_forward_sequence.3} parent=0 // pred_region
    _
  $region9: #{lstm_forward_sequence.3} parent=0 // pred_fallthru
    _
  // Predicated region
  $region10: #{lstm_forward_sequence.3} parent=0 // pred_check
    _
  $region11: #{lstm_forward_sequence.3} parent=0 // pred_check_branch
    %13 = sbr.rel (0) target = $region13
  $region12: #{lstm_forward_sequence.3} parent=0 // pred_region
    _
  $region13: #{lstm_forward_sequence.3} parent=0 // pred_fallthru
    _
  %v14 = vld [vmem:[%s0] sm:$0xff]
  %v15 = vld [vmem:[%s0 + $0x8] sm:$0xff]
  %v16 = vld [vmem:[%s0 + $0x10] sm:$0xff]
  %v17 = vld [vmem:[%s0 + $0x18] sm:$0xff]
  %v18 = vld [vmem:[%s1] sm:$0xff]
  %v19 = vld [vmem:[%s1 + $0x8] sm:$0xff]
  %v20 = vld [vmem:[%s1 + $0x10] sm:$0xff]
  %v21 = vld [vmem:[%s1 + $0x18] sm:$0xff]
  %v22 = vld [vmem:[%s1 + $0x20] sm:$0xff]
  %v23 = vld [vmem:[%s1 + $0x28] sm:$0xff]
  %v24 = vld [vmem:[%s1 + $0x30] sm:$0xff]
  %v25 = vld [vmem:[%s1 + $0x38] sm:$0xff]
  %v26 = vld [vmem:[%s2] sm:$0xf]
  %v28 = vlaneseq
  %v29 = vshrl.u32 %v28, 7
  %v30 = vsub.s32 0, %v29
  %v31 = vrot.slane %v26, %v30
  %v32 = vlaneseq
  %v33 = vshrl.u32 %v32, 7
  %v34 = vsub.s32 1, %v33
  %v35 = vrot.slane %v26, %v34
  %v36 = vlaneseq
  %v37 = vshrl.u32 %v36, 7
  %v38 = vsub.s32 2, %v37
  %v39 = vrot.slane %v26, %v38
  %v40 = vlaneseq
  %v41 = vshrl.u32 %v40, 7
  %v42 = vsub.s32 3, %v41
  %v43 = vrot.slane %v26, %v42
  %vm48 = vcmask 130048
  %v50 = vsel %vm48, %v14, 0
  %v53 = vsel %vm48, %v15, 0
  %v56 = vsel %vm48, %v16, 0
  %v59 = vsel %vm48, %v17, 0
  %61 = vmatprep.subr.mxu0 0.0
  %62 = vmatpush1.msra.mxu0 0.0
  %63 = vmatprep.subr.mxu0 0.0
  %64 = vmatpush1.msra.mxu0 0.0
  %65 = vmatprep.subr.mxu0 0.0
  %66 = vmatpush1.msra.mxu0 0.0
  %67 = vmatprep.subr.mxu0 0.0
  %68 = vmatpush1.msra.mxu0 0.0
  %69 = vmatprep.subr.mxu0 0.0
  %70 = vmatpush1.msra.mxu0 0.0
  %71 = vmatprep.subr.mxu0 0.0
  %72 = vmatpush1.msra.mxu0 0.0
  %73 = vmatprep.subr.mxu0 0.0
  %74 = vmatpush1.msra.mxu0 0.0
  %75 = vmatprep.subr.mxu0 0.0
  %76 = vmatpush1.msra.mxu0 0.0
  %77 = vmatprep.subr.mxu0 0.0
  %78 = vmatpush1.msra.mxu0 0.0
  %79 = vmatprep.subr.mxu0 0.0
  %80 = vmatpush1.msra.mxu0 0.0
  %81 = vmatprep.subr.mxu0 0.0
  %82 = vmatpush1.msra.mxu0 0.0
  %83 = vmatprep.subr.mxu0 0.0
  %84 = vmatpush1.msra.mxu0 0.0
  %85 = vmatprep.subr.mxu0 0.0
  %86 = vmatpush1.msra.mxu0 0.0
  %87 = vmatprep.subr.mxu0 0.0
  %88 = vmatpush1.msra.mxu0 0.0
  %89 = vmatprep.subr.mxu0 %v23
  %90 = vmatpush1.msra.mxu0 %v22
  %91 = vmatprep.subr.mxu0 %v19
  %92 = vmatpush1.msra.mxu0 %v18
  %93 = vmatprep.subr.mxu0 0.0
  %94 = vmatpush2.msra.mxu0 0.0
  %95 = vmatprep.subr.mxu0 0.0
  %96 = vmatpush2.msra.mxu0 0.0
  %97 = vmatprep.subr.mxu0 0.0
  %98 = vmatpush2.msra.mxu0 0.0
  %99 = vmatprep.subr.mxu0 0.0
  %100 = vmatpush2.msra.mxu0 0.0
  %101 = vmatprep.subr.mxu0 0.0
  %102 = vmatpush2.msra.mxu0 0.0
  %103 = vmatprep.subr.mxu0 0.0
  %104 = vmatpush2.msra.mxu0 0.0
  %105 = vmatprep.subr.mxu0 0.0
  %106 = vmatpush2.msra.mxu0 0.0
  %107 = vmatprep.subr.mxu0 0.0
  %108 = vmatpush2.msra.mxu0 0.0
  %109 = vmatprep.subr.mxu0 0.0
  %110 = vmatpush2.msra.mxu0 0.0
  %111 = vmatprep.subr.mxu0 0.0
  %112 = vmatpush2.msra.mxu0 0.0
  %113 = vmatprep.subr.mxu0 0.0
  %114 = vmatpush2.msra.mxu0 0.0
  %115 = vmatprep.subr.mxu0 0.0
  %116 = vmatpush2.msra.mxu0 0.0
  %117 = vmatprep.subr.mxu0 0.0
  %118 = vmatpush2.msra.mxu0 0.0
  %119 = vmatprep.subr.mxu0 0.0
  %120 = vmatpush2.msra.mxu0 0.0
  %121 = vmatprep.subr.mxu0 0.0
  %122 = vmatpush2.msra.mxu0 0.0
  %123 = vmatprep.subr.mxu0 0.0
  %124 = vmatpush2.msra.mxu0 0.0
  %125 = vmatprep.mubr.f32.mxu0 0.0
  %126 = vmatmul.mubr.f32.gmra.mxu0 %v50
  %v127 = vpop.f32.mrf.mxu0
  %v128 = vadd.f32 %v31, %v127
  %v129 = vpop.f32.mrf.mxu0
  %v130 = vadd.f32 %v35, %v129
  %131 = vmatprep.mubr.f32.mxu0 0.0
  %132 = vmatmul.mubr.f32.gmra.mxu0 %v53
  %v133 = vpop.f32.mrf.mxu0
  %v134 = vadd.f32 %v31, %v133
  %v135 = vpop.f32.mrf.mxu0
  %v136 = vadd.f32 %v35, %v135
  %137 = vmatprep.mubr.f32.mxu0 0.0
  %138 = vmatmul.mubr.f32.gmra.mxu0 %v56
  %v139 = vpop.f32.mrf.mxu0
  %v140 = vadd.f32 %v31, %v139
  %v141 = vpop.f32.mrf.mxu0
  %v142 = vadd.f32 %v35, %v141
  %143 = vmatprep.mubr.f32.mxu0 0.0
  %144 = vmatmul.mubr.f32.gmra.mxu0 %v59
  %v145 = vpop.f32.mrf.mxu0
  %v146 = vadd.f32 %v31, %v145
  %v147 = vpop.f32.mrf.mxu0
  %v148 = vadd.f32 %v35, %v147
  %149 = vdwg.mxu0
  %150 = vmatprep.subr.mxu0 0.0
  %151 = vmatpush1.msra.mxu0 0.0
  %152 = vmatprep.subr.mxu0 0.0
  %153 = vmatpush1.msra.mxu0 0.0
  %154 = vmatprep.subr.mxu0 0.0
  %155 = vmatpush1.msra.mxu0 0.0
  %156 = vmatprep.subr.mxu0 0.0
  %157 = vmatpush1.msra.mxu0 0.0
  %158 = vmatprep.subr.mxu0 0.0
  %159 = vmatpush1.msra.mxu0 0.0
  %160 = vmatprep.subr.mxu0 0.0
  %161 = vmatpush1.msra.mxu0 0.0
  %162 = vmatprep.subr.mxu0 0.0
  %163 = vmatpush1.msra.mxu0 0.0
  %164 = vmatprep.subr.mxu0 0.0
  %165 = vmatpush1.msra.mxu0 0.0
  %166 = vmatprep.subr.mxu0 0.0
  %167 = vmatpush1.msra.mxu0 0.0
  %168 = vmatprep.subr.mxu0 0.0
  %169 = vmatpush1.msra.mxu0 0.0
  %170 = vmatprep.subr.mxu0 0.0
  %171 = vmatpush1.msra.mxu0 0.0
  %172 = vmatprep.subr.mxu0 0.0
  %173 = vmatpush1.msra.mxu0 0.0
  %174 = vmatprep.subr.mxu0 0.0
  %175 = vmatpush1.msra.mxu0 0.0
  %176 = vmatprep.subr.mxu0 0.0
  %177 = vmatpush1.msra.mxu0 0.0
  %178 = vmatprep.subr.mxu0 %v25
  %179 = vmatpush1.msra.mxu0 %v24
  %180 = vmatprep.subr.mxu0 %v21
  %181 = vmatpush1.msra.mxu0 %v20
  %182 = vmatprep.subr.mxu0 0.0
  %183 = vmatpush2.msra.mxu0 0.0
  %184 = vmatprep.subr.mxu0 0.0
  %185 = vmatpush2.msra.mxu0 0.0
  %186 = vmatprep.subr.mxu0 0.0
  %187 = vmatpush2.msra.mxu0 0.0
  %188 = vmatprep.subr.mxu0 0.0
  %189 = vmatpush2.msra.mxu0 0.0
  %190 = vmatprep.subr.mxu0 0.0
  %191 = vmatpush2.msra.mxu0 0.0
  %192 = vmatprep.subr.mxu0 0.0
  %193 = vmatpush2.msra.mxu0 0.0
  %194 = vmatprep.subr.mxu0 0.0
  %195 = vmatpush2.msra.mxu0 0.0
  %196 = vmatprep.subr.mxu0 0.0
  %197 = vmatpush2.msra.mxu0 0.0
  %198 = vmatprep.subr.mxu0 0.0
  %199 = vmatpush2.msra.mxu0 0.0
  %200 = vmatprep.subr.mxu0 0.0
  %201 = vmatpush2.msra.mxu0 0.0
  %202 = vmatprep.subr.mxu0 0.0
  %203 = vmatpush2.msra.mxu0 0.0
  %204 = vmatprep.subr.mxu0 0.0
  %205 = vmatpush2.msra.mxu0 0.0
  %206 = vmatprep.subr.mxu0 0.0
  %207 = vmatpush2.msra.mxu0 0.0
  %208 = vmatprep.subr.mxu0 0.0
  %209 = vmatpush2.msra.mxu0 0.0
  %210 = vmatprep.subr.mxu0 0.0
  %211 = vmatpush2.msra.mxu0 0.0
  %212 = vmatprep.subr.mxu0 0.0
  %213 = vmatpush2.msra.mxu0 0.0
  %214 = vmatprep.mubr.f32.mxu0 0.0
  %215 = vmatmul.mubr.f32.gmra.mxu0 %v50
  %v216 = vpop.f32.mrf.mxu0
  %v217 = vadd.f32 %v39, %v216
  %v218 = vpop.f32.mrf.mxu0
  %v219 = vadd.f32 %v43, %v218
  %220 = vmatprep.mubr.f32.mxu0 0.0
  %221 = vmatmul.mubr.f32.gmra.mxu0 %v53
  %v222 = vpop.f32.mrf.mxu0
  %v223 = vadd.f32 %v39, %v222
  %v224 = vpop.f32.mrf.mxu0
  %v225 = vadd.f32 %v43, %v224
  %226 = vmatprep.mubr.f32.mxu0 0.0
  %227 = vmatmul.mubr.f32.gmra.mxu0 %v56
  %v228 = vpop.f32.mrf.mxu0
  %v229 = vadd.f32 %v39, %v228
  %v230 = vpop.f32.mrf.mxu0
  %v231 = vadd.f32 %v43, %v230
  %232 = vmatprep.mubr.f32.mxu0 0.0
  %233 = vmatmul.mubr.f32.gmra.mxu0 %v59
  %v234 = vpop.f32.mrf.mxu0
  %v235 = vadd.f32 %v39, %v234
  %v236 = vpop.f32.mrf.mxu0
  %v237 = vadd.f32 %v43, %v236
  %238 = vdwg.mxu0
  %239 = vst [vmem:[%s3] sm:$0xff] %v128
  %240 = vst [vmem:[%s3 + $0x8] sm:$0xff] %v130
  %241 = vst [vmem:[%s3 + $0x10] sm:$0xff] %v217
  %242 = vst [vmem:[%s3 + $0x18] sm:$0xff] %v219
  %243 = vst [vmem:[%s3 + $0x20] sm:$0xff] %v134
  %244 = vst [vmem:[%s3 + $0x28] sm:$0xff] %v136
  %245 = vst [vmem:[%s3 + $0x30] sm:$0xff] %v223
  %246 = vst [vmem:[%s3 + $0x38] sm:$0xff] %v225
  %247 = vst [vmem:[%s3 + $0x40] sm:$0xff] %v140
  %248 = vst [vmem:[%s3 + $0x48] sm:$0xff] %v142
  %249 = vst [vmem:[%s3 + $0x50] sm:$0xff] %v229
  %250 = vst [vmem:[%s3 + $0x58] sm:$0xff] %v231
  %251 = vst [vmem:[%s3 + $0x60] sm:$0xff] %v146
  %252 = vst [vmem:[%s3 + $0x68] sm:$0xff] %v148
  %253 = vst [vmem:[%s3 + $0x70] sm:$0xff] %v235
  %254 = vst [vmem:[%s3 + $0x78] sm:$0xff] %v237
  // Predicated region
  $region14: #{lstm_forward_sequence.3} parent=0 // pred_check
    _
  $region15: #{lstm_forward_sequence.3} parent=0 // pred_check_branch
    %256 = sbr.rel (0) target = $region17
  $region16: #{lstm_forward_sequence.3} parent=0 // pred_region
    _
  $region17: #{lstm_forward_sequence.3} parent=0 // pred_fallthru
    _
  // Predicated region
  $region18: #{lstm_forward_sequence.3} parent=0 // pred_check
    _
  $region19: #{lstm_forward_sequence.3} parent=0 // pred_check_branch
    %258 = sbr.rel (0) target = $region21
  $region20: #{lstm_forward_sequence.3} parent=0 // pred_region
    _
  $region21: #{lstm_forward_sequence.3} parent=0 // pred_fallthru
    _

// kernel: lstm_forward_sequence.5
$region0: #{lstm_forward_sequence.5}
  #allocation0 [shape = 'u32[]', space=smem, size = 0x4, offset = 0x4, fixed_abs, tag = 'smem constant byte address 0x4 - core index']
  #allocation1 [shape = 'u32[144,128]{1,0:T(1,128)}', space=vmem, size = 0x12000, scoped, tag = 'internal scratch']
  %s0 = inlined_call_operand.vmem [shape: f32[32,16], index: 0, kind: input, shape index: {}]
  %s1 = inlined_call_operand.vmem [shape: f32[32,128], index: 1, kind: input, shape index: {}]
  %s2 = inlined_call_operand.vmem [shape: f32[16,128], index: 2, kind: input, shape index: {}]
  %s3 = inlined_call_operand.vmem [shape: f32[1,128], index: 3, kind: input, shape index: {}]
  %s4 = inlined_call_operand.vmem [shape: f32[32,128], index: 4, kind: output, shape index: {}]
  %s5 = sld [smem:[#allocation0]]
  $region26: #{lstm_forward_sequence.5} parent=0
    _
  %s7 = ssub.s32 1, %s5
  %s8 = scalar_select 0, %s7, %s5
  // Predicated region
  $region2: #{lstm_forward_sequence.5} parent=0 // pred_check
    _
  $region3: #{lstm_forward_sequence.5} parent=0 // pred_check_branch
    %10 = sbr.rel (0) target = $region5
  $region4: #{lstm_forward_sequence.5} parent=0 // pred_region
    _
  $region5: #{lstm_forward_sequence.5} parent=0 // pred_fallthru
    _
  // Predicated region
  $region6: #{lstm_forward_sequence.5} parent=0 // pred_check
    _
  $region7: #{lstm_forward_sequence.5} parent=0 // pred_check_branch
    %12 = sbr.rel (0) target = $region9
  $region8: #{lstm_forward_sequence.5} parent=0 // pred_region
    _
  $region9: #{lstm_forward_sequence.5} parent=0 // pred_fallthru
    _
  // Predicated region
  $region10: #{lstm_forward_sequence.5} parent=0 // pred_check
    _
  $region11: #{lstm_forward_sequence.5} parent=0 // pred_check_branch
    %14 = sbr.rel (0) target = $region13
  $region12: #{lstm_forward_sequence.5} parent=0 // pred_region
    _
  $region13: #{lstm_forward_sequence.5} parent=0 // pred_fallthru
    _
  // Predicated region
  $region14: #{lstm_forward_sequence.5} parent=0 // pred_check
    _
  $region15: #{lstm_forward_sequence.5} parent=0 // pred_check_branch
    %16 = sbr.rel (0) target = $region17
  $region16: #{lstm_forward_sequence.5} parent=0 // pred_region
    _
  $region17: #{lstm_forward_sequence.5} parent=0 // pred_fallthru
    _
  %v17 = vld [vmem:[%s0] sm:$0xff]
  %v18 = vld [vmem:[%s0 + $0x8] sm:$0xff]
  %v19 = vld [vmem:[%s0 + $0x10] sm:$0xff]
  %v20 = vld [vmem:[%s0 + $0x18] sm:$0xff]
  %v21 = vld [vmem:[%s2] sm:$0xff]
  %v22 = vld [vmem:[%s2 + $0x8] sm:$0xff]
  %v23 = vld [vmem:[%s1] sm:$0xff]
  %v24 = vld [vmem:[%s1 + $0x8] sm:$0xff]
  %v25 = vld [vmem:[%s1 + $0x10] sm:$0xff]
  %v26 = vld [vmem:[%s1 + $0x18] sm:$0xff]
  %vm27 = vcmask 130048
  %v29 = vsel %vm27, %v17, 0
  %v32 = vsel %vm27, %v18, 0
  %v35 = vsel %vm27, %v19, 0
  %v38 = vsel %vm27, %v20, 0
  %40 = vmatprep.subr.mxu0 0.0
  %41 = vmatpush1.msra.mxu0 0.0
  %42 = vmatprep.subr.mxu0 0.0
  %43 = vmatpush1.msra.mxu0 0.0
  %44 = vmatprep.subr.mxu0 0.0
  %45 = vmatpush1.msra.mxu0 0.0
  %46 = vmatprep.subr.mxu0 0.0
  %47 = vmatpush1.msra.mxu0 0.0
  %48 = vmatprep.subr.mxu0 0.0
  %49 = vmatpush1.msra.mxu0 0.0
  %50 = vmatprep.subr.mxu0 0.0
  %51 = vmatpush1.msra.mxu0 0.0
  %52 = vmatprep.subr.mxu0 0.0
  %53 = vmatpush1.msra.mxu0 0.0
  %54 = vmatprep.subr.mxu0 0.0
  %55 = vmatpush1.msra.mxu0 0.0
  %56 = vmatprep.subr.mxu0 0.0
  %57 = vmatpush1.msra.mxu0 0.0
  %58 = vmatprep.subr.mxu0 0.0
  %59 = vmatpush1.msra.mxu0 0.0
  %60 = vmatprep.subr.mxu0 0.0
  %61 = vmatpush1.msra.mxu0 0.0
  %62 = vmatprep.subr.mxu0 0.0
  %63 = vmatpush1.msra.mxu0 0.0
  %64 = vmatprep.subr.mxu0 0.0
  %65 = vmatpush1.msra.mxu0 0.0
  %66 = vmatprep.subr.mxu0 0.0
  %67 = vmatpush1.msra.mxu0 0.0
  %68 = vmatprep.subr.mxu0 0.0
  %69 = vmatpush1.msra.mxu0 %v22
  %70 = vmatprep.subr.mxu0 0.0
  %71 = vmatpush1.msra.mxu0 %v21
  %72 = vmatprep.subr.mxu0 0.0
  %73 = vmatpush2.msra.mxu0 0.0
  %74 = vmatprep.subr.mxu0 0.0
  %75 = vmatpush2.msra.mxu0 0.0
  %76 = vmatprep.subr.mxu0 0.0
  %77 = vmatpush2.msra.mxu0 0.0
  %78 = vmatprep.subr.mxu0 0.0
  %79 = vmatpush2.msra.mxu0 0.0
  %80 = vmatprep.subr.mxu0 0.0
  %81 = vmatpush2.msra.mxu0 0.0
  %82 = vmatprep.subr.mxu0 0.0
  %83 = vmatpush2.msra.mxu0 0.0
  %84 = vmatprep.subr.mxu0 0.0
  %85 = vmatpush2.msra.mxu0 0.0
  %86 = vmatprep.subr.mxu0 0.0
  %87 = vmatpush2.msra.mxu0 0.0
  %88 = vmatprep.subr.mxu0 0.0
  %89 = vmatpush2.msra.mxu0 0.0
  %90 = vmatprep.subr.mxu0 0.0
  %91 = vmatpush2.msra.mxu0 0.0
  %92 = vmatprep.subr.mxu0 0.0
  %93 = vmatpush2.msra.mxu0 0.0
  %94 = vmatprep.subr.mxu0 0.0
  %95 = vmatpush2.msra.mxu0 0.0
  %96 = vmatprep.subr.mxu0 0.0
  %97 = vmatpush2.msra.mxu0 0.0
  %98 = vmatprep.subr.mxu0 0.0
  %99 = vmatpush2.msra.mxu0 0.0
  %100 = vmatprep.subr.mxu0 0.0
  %101 = vmatpush2.msra.mxu0 0.0
  %102 = vmatprep.subr.mxu0 0.0
  %103 = vmatpush2.msra.mxu0 0.0
  %104 = vmatprep.mubr.f32.mxu0 0.0
  %105 = vmatmul.mubr.f32.gmra.mxu0 %v29
  %v106 = vpop.f32.mrf.mxu0
  %v107 = vadd.f32 %v23, %v106
  %v108 = vpop.f32.mrf.mxu0
  %109 = vmatprep.mubr.f32.mxu0 0.0
  %110 = vmatmul.mubr.f32.gmra.mxu0 %v32
  %v111 = vpop.f32.mrf.mxu0
  %v112 = vadd.f32 %v24, %v111
  %v113 = vpop.f32.mrf.mxu0
  %114 = vmatprep.mubr.f32.mxu0 0.0
  %115 = vmatmul.mubr.f32.gmra.mxu0 %v35
  %v116 = vpop.f32.mrf.mxu0
  %v117 = vadd.f32 %v25, %v116
  %v118 = vpop.f32.mrf.mxu0
  %119 = vmatprep.mubr.f32.mxu0 0.0
  %120 = vmatmul.mubr.f32.gmra.mxu0 %v38
  %v121 = vpop.f32.mrf.mxu0
  %v122 = vadd.f32 %v26, %v121
  %v123 = vpop.f32.mrf.mxu0
  %124 = vdwg.mxu0
  %v125 = vld [vmem:[%s3] sm:$0x1]
  %v127 = vlaneseq
  %v128 = vshrl.u32 %v127, 7
  %v129 = vsub.s32 0, %v128
  %v130 = vrot.slane %v125, %v129
  %v132 = vadd.f32 %v107, %v130
  %v133 = vadd.f32 %v112, %v130
  %v134 = vadd.f32 %v117, %v130
  %v135 = vadd.f32 %v122, %v130
  %136 = vmax.xlane.f32.xlu0 %v132
  %v137 = vpop.xlane.xlu0 %136
  %138 = vmax.xlane.f32.xlu0 %v133
  %v139 = vpop.xlane.xlu0 %138
  %140 = vmax.xlane.f32.xlu0 %v134
  %v141 = vpop.xlane.xlu0 %140
  %142 = vmax.xlane.f32.xlu0 %v135
  %v143 = vpop.xlane.xlu0 %142
  %v144 = vsub.f32 %v132, %v137
  %v145 = vsub.f32 %v133, %v139
  %v146 = vsub.f32 %v134, %v141
  %v147 = vsub.f32 %v135, %v143
  %v148 = vmul.f32 %v144, 1.442695
  %v149 = vpow.pop %v148
  %v150 = vmul.f32 %v145, 1.442695
  %v151 = vpow.pop %v150
  %v152 = vmul.f32 %v146, 1.442695
  %v153 = vpow.pop %v152
  %v154 = vmul.f32 %v147, 1.442695
  %v155 = vpow.pop %v154
  %156 = vadd.xlane.f32.xlu0 %v149
  %v157 = vpop.xlane.xlu0 %156
  %158 = vadd.xlane.f32.xlu0 %v151
  %v159 = vpop.xlane.xlu0 %158
  %160 = vadd.xlane.f32.xlu0 %v153
  %v161 = vpop.xlane.xlu0 %160
  %162 = vadd.xlane.f32.xlu0 %v155
  %v163 = vpop.xlane.xlu0 %162
  %v164 = vlog2.pop %v157
  %v165 = vmul.f32 %v164, 0.6931472
  %v166 = vlog2.pop %v159
  %v167 = vmul.f32 %v166, 0.6931472
  %v168 = vlog2.pop %v161
  %v169 = vmul.f32 %v168, 0.6931472
  %v170 = vlog2.pop %v163
  %v171 = vmul.f32 %v170, 0.6931472
  %v172 = vsub.f32 %v144, %v165
  %v173 = vsub.f32 %v145, %v167
  %v174 = vsub.f32 %v146, %v169
  %v175 = vsub.f32 %v147, %v171
  %176 = vst [vmem:[%s4] sm:$0xff] %v172
  %177 = vst [vmem:[%s4 + $0x8] sm:$0xff] %v173
  %178 = vst [vmem:[%s4 + $0x10] sm:$0xff] %v174
  %179 = vst [vmem:[%s4 + $0x18] sm:$0xff] %v175
  // Predicated region
  $region18: #{lstm_forward_sequence.5} parent=0 // pred_check
    _
  $region19: #{lstm_forward_sequence.5} parent=0 // pred_check_branch
    %181 = sbr.rel (0) target = $region21
  $region20: #{lstm_forward_sequence.5} parent=0 // pred_region
    _
  $region21: #{lstm_forward_sequence.5} parent=0 // pred_fallthru
    _
  // Predicated region
  $region22: #{lstm_forward_sequence.5} parent=0 // pred_check
    _
  $region23: #{lstm_forward_sequence.5} parent=0 // pred_check_branch
    %183 = sbr.rel (0) target = $region25
  $region24: #{lstm_forward_sequence.5} parent=0 // pred_region
    _
  $region25: #{lstm_forward_sequence.5} parent=0 // pred_fallthru
    _

// kernel: lstm_forward_sequence.4
$region0: #{lstm_forward_sequence.4}
  #allocation0 [shape = 'u32[]', space=smem, size = 0x4, offset = 0x4, fixed_abs, tag = 'smem constant byte address 0x4 - core index']
  #allocation1 [shape = 'u32[144,128]{1,0:T(1,128)}', space=vmem, size = 0x12000, scoped, tag = 'internal scratch']
  #allocation2 [shape = 'f32[8,128]{1,0:T(8,128)}', space=vmem, size = 0x1000, scoped, tag = 'scratch operand']
  %s0 = inlined_call_operand.vmem [shape: f32[4,8,512], index: 0, kind: input, shape index: {}]
  %s1 = inlined_call_operand.vmem [shape: f32[8,128], index: 1, kind: input, shape index: {}]
  %s2 = inlined_call_operand.vmem [shape: f32[128,512], index: 2, kind: input, shape index: {}]
  %s3 = inlined_call_operand.vmem [shape: f32[128,128], index: 3, kind: input, shape index: {}]
  %s4 = inlined_call_operand.vmem [shape: f32[4,8,128], index: 4, kind: output, shape index: {0}]
  %s5 = inlined_call_operand.vmem [shape: f32[8,128], index: 5, kind: output, shape index: {1}]
  %6 = xla_tuple %s4, %s5
  %s7 = sld [smem:[#allocation0]]
  $region42: #{lstm_forward_sequence.4} parent=0
    _
  %s9 = ssub.s32 1, %s7
  %s10 = scalar_select 0, %s9, %s7
  // Predicated region
  $region2: #{lstm_forward_sequence.4} parent=0 // pred_check
    _
  $region3: #{lstm_forward_sequence.4} parent=0 // pred_check_branch
    %12 = sbr.rel (0) target = $region5
  $region4: #{lstm_forward_sequence.4} parent=0 // pred_region
    _
  $region5: #{lstm_forward_sequence.4} parent=0 // pred_fallthru
    _
  // Predicated region
  $region6: #{lstm_forward_sequence.4} parent=0 // pred_check
    _
  $region7: #{lstm_forward_sequence.4} parent=0 // pred_check_branch
    %14 = sbr.rel (0) target = $region9
  $region8: #{lstm_forward_sequence.4} parent=0 // pred_region
    _
  $region9: #{lstm_forward_sequence.4} parent=0 // pred_fallthru
    _
  // Predicated region
  $region10: #{lstm_forward_sequence.4} parent=0 // pred_check
    _
  $region11: #{lstm_forward_sequence.4} parent=0 // pred_check_branch
    %16 = sbr.rel (0) target = $region13
  $region12: #{lstm_forward_sequence.4} parent=0 // pred_region
    _
  $region13: #{lstm_forward_sequence.4} parent=0 // pred_fallthru
    _
  // Predicated region
  $region14: #{lstm_forward_sequence.4} parent=0 // pred_check
    _
  $region15: #{lstm_forward_sequence.4} parent=0 // pred_check_branch
    %18 = sbr.rel (0) target = $region17
  $region16: #{lstm_forward_sequence.4} parent=0 // pred_region
    _
  $region17: #{lstm_forward_sequence.4} parent=0 // pred_fallthru
    _
  %p19 = scmp.eq.s32.totalorder 0, 0
  // Predicated region
  $region18: #{lstm_forward_sequence.4} parent=0 // pred_check
    %p20 = pneg %p19
  $region19: #{lstm_forward_sequence.4} parent=0 // pred_check_branch
    %22 = sbr.rel (%p20) target = $region21
  $region20: #{lstm_forward_sequence.4} parent=0 // pred_region
    %v23 = vld [vmem:[%s1] sm:$0xff]
    %24 = vst [vmem:[#allocation2] sm:$0xff] %v23
  $region21: #{lstm_forward_sequence.4} parent=0 // pred_fallthru
    _
  %v25 = vld [vmem:[#allocation2] sm:$0xff]
  %v26 = vld [vmem:[%s3] sm:$0xff]
  %v27 = vld [vmem:[%s3 + $0x8] sm:$0xff]
  %v28 = vld [vmem:[%s3 + $0x10] sm:$0xff]
  %v29 = vld [vmem:[%s3 + $0x18] sm:$0xff]
  %v30 = vld [vmem:[%s3 + $0x20] sm:$0xff]
  %v31 = vld [vmem:[%s3 + $0x28] sm:$0xff]
  %v32 = vld [vmem:[%s3 + $0x30] sm:$0xff]
  %v33 = vld [vmem:[%s3 + $0x38] sm:$0xff]
  %v34 = vld [vmem:[%s3 + $0x40] sm:$0xff]
  %v35 = vld [vmem:[%s3 + $0x48] sm:$0xff]
  %v36 = vld [vmem:[%s3 + $0x50] sm:$0xff]
  %v37 = vld [vmem:[%s3 + $0x58] sm:$0xff]
  %v38 = vld [vmem:[%s3 + $0x60] sm:$0xff]
  %v39 = vld [vmem:[%s3 + $0x68] sm:$0xff]
  %v40 = vld [vmem:[%s3 + $0x70] sm:$0xff]
  %v41 = vld [vmem:[%s3 + $0x78] sm:$0xff]
  %42 = vmatprep.subr.mxu0 0.0
  %43 = vmatpush1.msra.mxu0 %v41
  %44 = vmatprep.subr.mxu0 0.0
  %45 = vmatpush1.msra.mxu0 %v40
  %46 = vmatprep.subr.mxu0 0.0
  %47 = vmatpush1.msra.mxu0 %v39
  %48 = vmatprep.subr.mxu0 0.0
  %49 = vmatpush1.msra.mxu0 %v38
  %50 = vmatprep.subr.mxu0 0.0
  %51 = vmatpush1.msra.mxu0 %v37
  %52 = vmatprep.subr.mxu0 0.0
  %53 = vmatpush1.msra.mxu0 %v36
  %54 = vmatprep.subr.mxu0 0.0
  %55 = vmatpush1.msra.mxu0 %v35
  %56 = vmatprep.subr.mxu0 0.0
  %57 = vmatpush1.msra.mxu0 %v34
  %58 = vmatprep.subr.mxu0 0.0
  %59 = vmatpush1.msra.mxu0 %v33
  %60 = vmatprep.subr.mxu0 0.0
  %61 = vmatpush1.msra.mxu0 %v32
  %62 = vmatprep.subr.mxu0 0.0
  %63 = vmatpush1.msra.mxu0 %v31
  %64 = vmatprep.subr.mxu0 0.0
  %65 = vmatpush1.msra.mxu0 %v30
  %66 = vmatprep.subr.mxu0 0.0
  %67 = vmatpush1.msra.mxu0 %v29
  %68 = vmatprep.subr.mxu0 0.0
  %69 = vmatpush1.msra.mxu0 %v28
  %70 = vmatprep.subr.mxu0 0.0
  %71 = vmatpush1.msra.mxu0 %v27
  %72 = vmatprep.subr.mxu0 0.0
  %73 = vmatpush1.msra.mxu0 %v26
  %74 = vmatprep.subr.mxu0 0.0
  %75 = vmatpush2.msra.mxu0 0.0
  %76 = vmatprep.subr.mxu0 0.0
  %77 = vmatpush2.msra.mxu0 0.0
  %78 = vmatprep.subr.mxu0 0.0
  %79 = vmatpush2.msra.mxu0 0.0
  %80 = vmatprep.subr.mxu0 0.0
  %81 = vmatpush2.msra.mxu0 0.0
  %82 = vmatprep.subr.mxu0 0.0
  %83 = vmatpush2.msra.mxu0 0.0
  %84 = vmatprep.subr.mxu0 0.0
  %85 = vmatpush2.msra.mxu0 0.0
  %86 = vmatprep.subr.mxu0 0.0
  %87 = vmatpush2.msra.mxu0 0.0
  %88 = vmatprep.subr.mxu0 0.0
  %89 = vmatpush2.msra.mxu0 0.0
  %90 = vmatprep.subr.mxu0 0.0
  %91 = vmatpush2.msra.mxu0 0.0
  %92 = vmatprep.subr.mxu0 0.0
  %93 = vmatpush2.msra.mxu0 0.0
  %94 = vmatprep.subr.mxu0 0.0
  %95 = vmatpush2.msra.mxu0 0.0
  %96 = vmatprep.subr.mxu0 0.0
  %97 = vmatpush2.msra.mxu0 0.0
  %98 = vmatprep.subr.mxu0 0.0
  %99 = vmatpush2.msra.mxu0 0.0
  %100 = vmatprep.subr.mxu0 0.0
  %101 = vmatpush2.msra.mxu0 0.0
  %102 = vmatprep.subr.mxu0 0.0
  %103 = vmatpush2.msra.mxu0 0.0
  %104 = vmatprep.subr.mxu0 0.0
  %105 = vmatpush2.msra.mxu0 0.0
  %106 = vmatprep.mubr.f32.mxu0 0.0
  %107 = vmatmul.mubr.f32.gmra.mxu0 %v25
  %v108 = vpop.f32.mrf.mxu0
  %v109 = vadd.f32 0.0, %v108
  %v110 = vpop.f32.mrf.mxu0
  %111 = vdwg.mxu0
  %112 = vst [vmem:[%s4] sm:$0xff] %v109
  %v113 = vld [vmem:[%s2] sm:$0xff]
  %v114 = vld [vmem:[%s2 + $0x8] sm:$0xff]
  %v115 = vld [vmem:[%s2 + $0x10] sm:$0xff]
  %v116 = vld [vmem:[%s2 + $0x18] sm:$0xff]
  %v117 = vld [vmem:[%s2 + $0x20] sm:$0xff]
  %v118 = vld [vmem:[%s2 + $0x28] sm:$0xff]
  %v119 = vld [vmem:[%s2 + $0x30] sm:$0xff]
  %v120 = vld [vmem:[%s2 + $0x38] sm:$0xff]
  %v121 = vld [vmem:[%s2 + $0x40] sm:$0xff]
  %v122 = vld [vmem:[%s2 + $0x48] sm:$0xff]
  %v123 = vld [vmem:[%s2 + $0x50] sm:$0xff]
  %v124 = vld [vmem:[%s2 + $0x58] sm:$0xff]
  %v125 = vld [vmem:[%s2 + $0x60] sm:$0xff]
  %v126 = vld [vmem:[%s2 + $0x68] sm:$0xff]
  %v127 = vld [vmem:[%s2 + $0x70] sm:$0xff]
  %v128 = vld [vmem:[%s2 + $0x78] sm:$0xff]
  %v129 = vld [vmem:[%s2 + $0x80] sm:$0xff]
  %v130 = vld [vmem:[%s2 + $0x88] sm:$0xff]
  %v131 = vld [vmem:[%s2 + $0x90] sm:$0xff]
  %v132 = vld [vmem:[%s2 + $0x98] sm:$0xff]
  %v133 = vld [vmem:[%s2 + $0xa0] sm:$0xff]
  %v134 = vld [vmem:[%s2 + $0xa8] sm:$0xff]
  %v135 = vld [vmem:[%s2 + $0xb0] sm:$0xff]
  %v136 = vld [vmem:[%s2 + $0xb8] sm:$0xff]
  %v137 = vld [vmem:[%s2 + $0xc0] sm:$0xff]
  %v138 = vld [vmem:[%s2 + $0xc8] sm:$0xff]
  %v139 = vld [vmem:[%s2 + $0xd0] sm:$0xff]
  %v140 = vld [vmem:[%s2 + $0xd8] sm:$0xff]
  %v141 = vld [vmem:[%s2 + $0xe0] sm:$0xff]
  %v142 = vld [vmem:[%s2 + $0xe8] sm:$0xff]
  %v143 = vld [vmem:[%s2 + $0xf0] sm:$0xff]
  %v144 = vld [vmem:[%s2 + $0xf8] sm:$0xff]
  %v145 = vld [vmem:[%s2 + $0x100] sm:$0xff]
  %v146 = vld [vmem:[%s2 + $0x108] sm:$0xff]
  %v147 = vld [vmem:[%s2 + $0x110] sm:$0xff]
  %v148 = vld [vmem:[%s2 + $0x118] sm:$0xff]
  %v149 = vld [vmem:[%s2 + $0x120] sm:$0xff]
  %v150 = vld [vmem:[%s2 + $0x128] sm:$0xff]
  %v151 = vld [vmem:[%s2 + $0x130] sm:$0xff]
  %v152 = vld [vmem:[%s2 + $0x138] sm:$0xff]
  %v153 = vld [vmem:[%s2 + $0x140] sm:$0xff]
  %v154 = vld [vmem:[%s2 + $0x148] sm:$0xff]
  %v155 = vld [vmem:[%s2 + $0x150] sm:$0xff]
  %v156 = vld [vmem:[%s2 + $0x158] sm:$0xff]
  %v157 = vld [vmem:[%s2 + $0x160] sm:$0xff]
  %v158 = vld [vmem:[%s2 + $0x168] sm:$0xff]
  %v159 = vld [vmem:[%s2 + $0x170] sm:$0xff]
  %v160 = vld [vmem:[%s2 + $0x178] sm:$0xff]
  %v161 = vld [vmem:[%s2 + $0x180] sm:$0xff]
  %v162 = vld [vmem:[%s2 + $0x188] sm:$0xff]
  %v163 = vld [vmem:[%s2 + $0x190] sm:$0xff]
  %v164 = vld [vmem:[%s2 + $0x198] sm:$0xff]
  %v165 = vld [vmem:[%s2 + $0x1a0] sm:$0xff]
  %v166 = vld [vmem:[%s2 + $0x1a8] sm:$0xff]
  %v167 = vld [vmem:[%s2 + $0x1b0] sm:$0xff]
  %v168 = vld [vmem:[%s2 + $0x1b8] sm:$0xff]
  %v169 = vld [vmem:[%s2 + $0x1c0] sm:$0xff]
  %v170 = vld [vmem:[%s2 + $0x1c8] sm:$0xff]
  %v171 = vld [vmem:[%s2 + $0x1d0] sm:$0xff]
  %v172 = vld [vmem:[%s2 + $0x1d8] sm:$0xff]
  %v173 = vld [vmem:[%s2 + $0x1e0] sm:$0xff]
  %v174 = vld [vmem:[%s2 + $0x1e8] sm:$0xff]
  %v175 = vld [vmem:[%s2 + $0x1f0] sm:$0xff]
  %v176 = vld [vmem:[%s2 + $0x1f8] sm:$0xff]
  %v177 = vld [vmem:[%s0] sm:$0xff]
  %v178 = vld [vmem:[%s0 + $0x8] sm:$0xff]
  %v179 = vld [vmem:[%s0 + $0x10] sm:$0xff]
  %v180 = vld [vmem:[%s0 + $0x18] sm:$0xff]
  %181 = vmatprep.subr.mxu0 %v174
  %182 = vmatpush1.msra.mxu0 %v173
  %183 = vmatprep.subr.mxu0 %v170
  %184 = vmatpush1.msra.mxu0 %v169
  %185 = vmatprep.subr.mxu0 %v166
  %186 = vmatpush1.msra.mxu0 %v165
  %187 = vmatprep.subr.mxu0 %v162
  %188 = vmatpush1.msra.mxu0 %v161
  %189 = vmatprep.subr.mxu0 %v158
  %190 = vmatpush1.msra.mxu0 %v157
  %191 = vmatprep.subr.mxu0 %v154
  %192 = vmatpush1.msra.mxu0 %v153
  %193 = vmatprep.subr.mxu0 %v150
  %194 = vmatpush1.msra.mxu0 %v149
  %195 = vmatprep.subr.mxu0 %v146
  %196 = vmatpush1.msra.mxu0 %v145
  %197 = vmatprep.subr.mxu0 %v142
  %198 = vmatpush1.msra.mxu0 %v141
  %199 = vmatprep.subr.mxu0 %v138
  %200 = vmatpush1.msra.mxu0 %v137
  %201 = vmatprep.subr.mxu0 %v134
  %202 = vmatpush1.msra.mxu0 %v133
  %203 = vmatprep.subr.mxu0 %v130
  %204 = vmatpush1.msra.mxu0 %v129
  %205 = vmatprep.subr.mxu0 %v126
  %206 = vmatpush1.msra.mxu0 %v125
  %207 = vmatprep.subr.mxu0 %v122
  %208 = vmatpush1.msra.mxu0 %v121
  %209 = vmatprep.subr.mxu0 %v118
  %210 = vmatpush1.msra.mxu0 %v117
  %211 = vmatprep.subr.mxu0 %v114
  %212 = vmatpush1.msra.mxu0 %v113
  %213 = vmatprep.subr.mxu0 0.0
  %214 = vmatpush2.msra.mxu0 0.0
  %215 = vmatprep.subr.mxu0 0.0
  %216 = vmatpush2.msra.mxu0 0.0
  %217 = vmatprep.subr.mxu0 0.0
  %218 = vmatpush2.msra.mxu0 0.0
  %219 = vmatprep.subr.mxu0 0.0
  %220 = vmatpush2.msra.mxu0 0.0
  %221 = vmatprep.subr.mxu0 0.0
  %222 = vmatpush2.msra.mxu0 0.0
  %223 = vmatprep.subr.mxu0 0.0
  %224 = vmatpush2.msra.mxu0 0.0
  %225 = vmatprep.subr.mxu0 0.0
  %226 = vmatpush2.msra.mxu0 0.0
  %227 = vmatprep.subr.mxu0 0.0
  %228 = vmatpush2.msra.mxu0 0.0
  %229 = vmatprep.subr.mxu0 0.0
  %230 = vmatpush2.msra.mxu0 0.0
  %231 = vmatprep.subr.mxu0 0.0
  %232 = vmatpush2.msra.mxu0 0.0
  %233 = vmatprep.subr.mxu0 0.0
  %234 = vmatpush2.msra.mxu0 0.0
  %235 = vmatprep.subr.mxu0 0.0
  %236 = vmatpush2.msra.mxu0 0.0
  %237 = vmatprep.subr.mxu0 0.0
  %238 = vmatpush2.msra.mxu0 0.0
  %239 = vmatprep.subr.mxu0 0.0
  %240 = vmatpush2.msra.mxu0 0.0
  %241 = vmatprep.subr.mxu0 0.0
  %242 = vmatpush2.msra.mxu0 0.0
  %243 = vmatprep.subr.mxu0 0.0
  %244 = vmatpush2.msra.mxu0 0.0
  %245 = vmatprep.mubr.f32.mxu0 0.0
  %246 = vmatmul.mubr.f32.gmra.mxu0 %v25
  %v247 = vpop.f32.mrf.mxu0
  %v248 = vadd.f32 %v177, %v247
  %v249 = vpop.f32.mrf.mxu0
  %v250 = vadd.f32 %v178, %v249
  %251 = vdwg.mxu0
  %252 = vmatprep.subr.mxu0 %v176
  %253 = vmatpush1.msra.mxu0 %v175
  %254 = vmatprep.subr.mxu0 %v172
  %255 = vmatpush1.msra.mxu0 %v171
  %256 = vmatprep.subr.mxu0 %v168
  %257 = vmatpush1.msra.mxu0 %v167
  %258 = vmatprep.subr.mxu0 %v164
  %259 = vmatpush1.msra.mxu0 %v163
  %260 = vmatprep.subr.mxu0 %v160
  %261 = vmatpush1.msra.mxu0 %v159
  %262 = vmatprep.subr.mxu0 %v156
  %263 = vmatpush1.msra.mxu0 %v155
  %264 = vmatprep.subr.mxu0 %v152
  %265 = vmatpush1.msra.mxu0 %v151
  %266 = vmatprep.subr.mxu0 %v148
  %267 = vmatpush1.msra.mxu0 %v147
  %268 = vmatprep.subr.mxu0 %v144
  %269 = vmatpush1.msra.mxu0 %v143
  %270 = vmatprep.subr.mxu0 %v140
  %271 = vmatpush1.msra.mxu0 %v139
  %272 = vmatprep.subr.mxu0 %v136
  %273 = vmatpush1.msra.mxu0 %v135
  %274 = vmatprep.subr.mxu0 %v132
  %275 = vmatpush1.msra.mxu0 %v131
  %276 = vmatprep.subr.mxu0 %v128
  %277 = vmatpush1.msra.mxu0 %v127
  %278 = vmatprep.subr.mxu0 %v124
  %279 = vmatpush1.msra.mxu0 %v123
  %280 = vmatprep.subr.mxu0 %v120
  %281 = vmatpush1.msra.mxu0 %v119
  %282 = vmatprep.subr.mxu0 %v116
  %283 = vmatpush1.msra.mxu0 %v115
  %284 = vmatprep.subr.mxu0 0.0
  %285 = vmatpush2.msra.mxu0 0.0
  %286 = vmatprep.subr.mxu0 0.0
  %287 = vmatpush2.msra.mxu0 0.0
  %288 = vmatprep.subr.mxu0 0.0
  %289 = vmatpush2.msra.mxu0 0.0
  %290 = vmatprep.subr.mxu0 0.0
  %291 = vmatpush2.msra.mxu0 0.0
  %292 = vmatprep.subr.mxu0 0.0
  %293 = vmatpush2.msra.mxu0 0.0
  %294 = vmatprep.subr.mxu0 0.0
  %295 = vmatpush2.msra.mxu0 0.0
  %296 = vmatprep.subr.mxu0 0.0
  %297 = vmatpush2.msra.mxu0 0.0
  %298 = vmatprep.subr.mxu0 0.0
  %299 = vmatpush2.msra.mxu0 0.0
  %300 = vmatprep.subr.mxu0 0.0
  %301 = vmatpush2.msra.mxu0 0.0
  %302 = vmatprep.subr.mxu0 0.0
  %303 = vmatpush2.msra.mxu0 0.0
  %304 = vmatprep.subr.mxu0 0.0
  %305 = vmatpush2.msra.mxu0 0.0
  %306 = vmatprep.subr.mxu0 0.0
  %307 = vmatpush2.msra.mxu0 0.0
  %308 = vmatprep.subr.mxu0 0.0
  %309 = vmatpush2.msra.mxu0 0.0
  %310 = vmatprep.subr.mxu0 0.0
  %311 = vmatpush2.msra.mxu0 0.0
  %312 = vmatprep.subr.mxu0 0.0
  %313 = vmatpush2.msra.mxu0 0.0
  %314 = vmatprep.subr.mxu0 0.0
  %315 = vmatpush2.msra.mxu0 0.0
  %316 = vmatprep.mubr.f32.mxu0 0.0
  %317 = vmatmul.mubr.f32.gmra.mxu0 %v25
  %v318 = vpop.f32.mrf.mxu0
  %v319 = vadd.f32 %v179, %v318
  %v320 = vpop.f32.mrf.mxu0
  %v321 = vadd.f32 %v180, %v320
  %322 = vdwg.mxu0
  %v323 = vtanh.pop %v248
  %v324 = vxor.u32 %v250, 2147483648
  %v325 = vmul.f32 %v324, 1.442695
  %v326 = vpow.pop %v325
  %v327 = vadd.f32 %v326, 1.0
  %v328 = vrcp.pop %v327
  %v329 = vmul.f32 1.0, %v328
  %v330 = vxor.u32 %v319, 2147483648
  %v331 = vmul.f32 %v330, 1.442695
  %v332 = vpow.pop %v331
  %v333 = vadd.f32 %v332, 1.0
  %v334 = vrcp.pop %v333
  %v335 = vmul.f32 1.0, %v334
  %v336 = vxor.u32 %v321, 2147483648
  %v337 = vmul.f32 %v336, 1.442695
  %v338 = vpow.pop %v337
  %v339 = vadd.f32 %v338, 1.0
  %v340 = vrcp.pop %v339
  %v341 = vmul.f32 1.0, %v340
  %v342 = vmul.f32 %v335, %v25
  %v343 = vmul.f32 %v329, %v323
  %v344 = vadd.f32 %v342, %v343
  %v345 = vtanh.pop %v344
  %v346 = vmul.f32 %v341, %v345
  %v347 = vld [vmem:[%s3] sm:$0xff]
  %v348 = vld [vmem:[%s3 + $0x8] sm:$0xff]
  %v349 = vld [vmem:[%s3 + $0x10] sm:$0xff]
  %v350 = vld [vmem:[%s3 + $0x18] sm:$0xff]
  %v351 = vld [vmem:[%s3 + $0x20] sm:$0xff]
  %v352 = vld [vmem:[%s3 + $0x28] sm:$0xff]
  %v353 = vld [vmem:[%s3 + $0x30] sm:$0xff]
  %v354 = vld [vmem:[%s3 + $0x38] sm:$0xff]
  %v355 = vld [vmem:[%s3 + $0x40] sm:$0xff]
  %v356 = vld [vmem:[%s3 + $0x48] sm:$0xff]
  %v357 = vld [vmem:[%s3 + $0x50] sm:$0xff]
  %v358 = vld [vmem:[%s3 + $0x58] sm:$0xff]
  %v359 = vld [vmem:[%s3 + $0x60] sm:$0xff]
  %v360 = vld [vmem:[%s3 + $0x68] sm:$0xff]
  %v361 = vld [vmem:[%s3 + $0x70] sm:$0xff]
  %v362 = vld [vmem:[%s3 + $0x78] sm:$0xff]
  %363 = vmatprep.subr.mxu0 0.0
  %364 = vmatpush1.msra.mxu0 %v362
  %365 = vmatprep.subr.mxu0 0.0
  %366 = vmatpush1.msra.mxu0 %v361
  %367 = vmatprep.subr.mxu0 0.0
  %368 = vmatpush1.msra.mxu0 %v360
  %369 = vmatprep.subr.mxu0 0.0
  %370 = vmatpush1.msra.mxu0 %v359
  %371 = vmatprep.subr.mxu0 0.0
  %372 = vmatpush1.msra.mxu0 %v358
  %373 = vmatprep.subr.mxu0 0.0
  %374 = vmatpush1.msra.mxu0 %v357
  %375 = vmatprep.subr.mxu0 0.0
  %376 = vmatpush1.msra.mxu0 %v356
  %377 = vmatprep.subr.mxu0 0.0
  %378 = vmatpush1.msra.mxu0 %v355
  %379 = vmatprep.subr.mxu0 0.0
  %380 = vmatpush1.msra.mxu0 %v354
  %381 = vmatprep.subr.mxu0 0.0
  %382 = vmatpush1.msra.mxu0 %v353
  %383 = vmatprep.subr.mxu0 0.0
  %384 = vmatpush1.msra.mxu0 %v352
  %385 = vmatprep.subr.mxu0 0.0
  %386 = vmatpush1.msra.mxu0 %v351
  %387 = vmatprep.subr.mxu0 0.0
  %388 = vmatpush1.msra.mxu0 %v350
  %389 = vmatprep.subr.mxu0 0.0
  %390 = vmatpush1.msra.mxu0 %v349
  %391 = vmatprep.subr.mxu0 0.0
  %392 = vmatpush1.msra.mxu0 %v348
  %393 = vmatprep.subr.mxu0 0.0
  %394 = vmatpush1.msra.mxu0 %v347
  %395 = vmatprep.subr.mxu0 0.0
  %396 = vmatpush2.msra.mxu0 0.0
  %397 = vmatprep.subr.mxu0 0.0
  %398 = vmatpush2.msra.mxu0 0.0
  %399 = vmatprep.subr.mxu0 0.0
  %400 = vmatpush2.msra.mxu0 0.0
  %401 = vmatprep.subr.mxu0 0.0
  %402 = vmatpush2.msra.mxu0 0.0
  %403 = vmatprep.subr.mxu0 0.0
  %404 = vmatpush2.msra.mxu0 0.0
  %405 = vmatprep.subr.mxu0 0.0
  %406 = vmatpush2.msra.mxu0 0.0
  %407 = vmatprep.subr.mxu0 0.0
  %408 = vmatpush2.msra.mxu0 0.0
  %409 = vmatprep.subr.mxu0 0.0
  %410 = vmatpush2.msra.mxu0 0.0
  %411 = vmatprep.subr.mxu0 0.0
  %412 = vmatpush2.msra.mxu0 0.0
  %413 = vmatprep.subr.mxu0 0.0
  %414 = vmatpush2.msra.mxu0 0.0
  %415 = vmatprep.subr.mxu0 0.0
  %416 = vmatpush2.msra.mxu0 0.0
  %417 = vmatprep.subr.mxu0 0.0
  %418 = vmatpush2.msra.mxu0 0.0
  %419 = vmatprep.subr.mxu0 0.0
  %420 = vmatpush2.msra.mxu0 0.0
  %421 = vmatprep.subr.mxu0 0.0
  %422 = vmatpush2.msra.mxu0 0.0
  %423 = vmatprep.subr.mxu0 0.0
  %424 = vmatpush2.msra.mxu0 0.0
  %425 = vmatprep.subr.mxu0 0.0
  %426 = vmatpush2.msra.mxu0 0.0
  %427 = vmatprep.mubr.f32.mxu0 0.0
  %428 = vmatmul.mubr.f32.gmra.mxu0 %v346
  %v429 = vpop.f32.mrf.mxu0
  %v430 = vadd.f32 0.0, %v429
  %v431 = vpop.f32.mrf.mxu0
  %432 = vdwg.mxu0
  %s433 = scalar_lea.vmem %s4, 8
  %434 = vst [vmem:[%s433] sm:$0xff] %v430
  %v435 = vld [vmem:[%s2] sm:$0xff]
  %v436 = vld [vmem:[%s2 + $0x8] sm:$0xff]
  %v437 = vld [vmem:[%s2 + $0x10] sm:$0xff]
  %v438 = vld [vmem:[%s2 + $0x18] sm:$0xff]
  %v439 = vld [vmem:[%s2 + $0x20] sm:$0xff]
  %v440 = vld [vmem:[%s2 + $0x28] sm:$0xff]
  %v441 = vld [vmem:[%s2 + $0x30] sm:$0xff]
  %v442 = vld [vmem:[%s2 + $0x38] sm:$0xff]
  %v443 = vld [vmem:[%s2 + $0x40] sm:$0xff]
  %v444 = vld [vmem:[%s2 + $0x48] sm:$0xff]
  %v445 = vld [vmem:[%s2 + $0x50] sm:$0xff]
  %v446 = vld [vmem:[%s2 + $0x58] sm:$0xff]
  %v447 = vld [vmem:[%s2 + $0x60] sm:$0xff]
  %v448 = vld [vmem:[%s2 + $0x68] sm:$0xff]
  %v449 = vld [vmem:[%s2 + $0x70] sm:$0xff]
  %v450 = vld [vmem:[%s2 + $0x78] sm:$0xff]
  %v451 = vld [vmem:[%s2 + $0x80] sm:$0xff]
  %v452 = vld [vmem:[%s2 + $0x88] sm:$0xff]
  %v453 = vld [vmem:[%s2 + $0x90] sm:$0xff]
  %v454 = vld [vmem:[%s2 + $0x98] sm:$0xff]
  %v455 = vld [vmem:[%s2 + $0xa0] sm:$0xff]
  %v456 = vld [vmem:[%s2 + $0xa8] sm:$0xff]
  %v457 = vld [vmem:[%s2 + $0xb0] sm:$0xff]
  %v458 = vld [vmem:[%s2 + $0xb8] sm:$0xff]
  %v459 = vld [vmem:[%s2 + $0xc0] sm:$0xff]
  %v460 = vld [vmem:[%s2 + $0xc8] sm:$0xff]
  %v461 = vld [vmem:[%s2 + $0xd0] sm:$0xff]
  %v462 = vld [vmem:[%s2 + $0xd8] sm:$0xff]
  %v463 = vld [vmem:[%s2 + $0xe0] sm:$0xff]
  %v464 = vld [vmem:[%s2 + $0xe8] sm:$0xff]
  %v465 = vld [vmem:[%s2 + $0xf0] sm:$0xff]
  %v466 = vld [vmem:[%s2 + $0xf8] sm:$0xff]
  %v467 = vld [vmem:[%s2 + $0x100] sm:$0xff]
  %v468 = vld [vmem:[%s2 + $0x108] sm:$0xff]
  %v469 = vld [vmem:[%s2 + $0x110] sm:$0xff]
  %v470 = vld [vmem:[%s2 + $0x118] sm:$0xff]
  %v471 = vld [vmem:[%s2 + $0x120] sm:$0xff]
  %v472 = vld [vmem:[%s2 + $0x128] sm:$0xff]
  %v473 = vld [vmem:[%s2 + $0x130] sm:$0xff]
  %v474 = vld [vmem:[%s2 + $0x138] sm:$0xff]
  %v475 = vld [vmem:[%s2 + $0x140] sm:$0xff]
  %v476 = vld [vmem:[%s2 + $0x148] sm:$0xff]
  %v477 = vld [vmem:[%s2 + $0x150] sm:$0xff]
  %v478 = vld [vmem:[%s2 + $0x158] sm:$0xff]
  %v479 = vld [vmem:[%s2 + $0x160] sm:$0xff]
  %v480 = vld [vmem:[%s2 + $0x168] sm:$0xff]
  %v481 = vld [vmem:[%s2 + $0x170] sm:$0xff]
  %v482 = vld [vmem:[%s2 + $0x178] sm:$0xff]
  %v483 = vld [vmem:[%s2 + $0x180] sm:$0xff]
  %v484 = vld [vmem:[%s2 + $0x188] sm:$0xff]
  %v485 = vld [vmem:[%s2 + $0x190] sm:$0xff]
  %v486 = vld [vmem:[%s2 + $0x198] sm:$0xff]
  %v487 = vld [vmem:[%s2 + $0x1a0] sm:$0xff]
  %v488 = vld [vmem:[%s2 + $0x1a8] sm:$0xff]
  %v489 = vld [vmem:[%s2 + $0x1b0] sm:$0xff]
  %v490 = vld [vmem:[%s2 + $0x1b8] sm:$0xff]
  %v491 = vld [vmem:[%s2 + $0x1c0] sm:$0xff]
  %v492 = vld [vmem:[%s2 + $0x1c8] sm:$0xff]
  %v493 = vld [vmem:[%s2 + $0x1d0] sm:$0xff]
  %v494 = vld [vmem:[%s2 + $0x1d8] sm:$0xff]
  %v495 = vld [vmem:[%s2 + $0x1e0] sm:$0xff]
  %v496 = vld [vmem:[%s2 + $0x1e8] sm:$0xff]
  %v497 = vld [vmem:[%s2 + $0x1f0] sm:$0xff]
  %v498 = vld [vmem:[%s2 + $0x1f8] sm:$0xff]
  %s499 = scalar_lea.vmem %s0, 32
  %v500 = vld [vmem:[%s499] sm:$0xff]
  %v501 = vld [vmem:[%s499 + $0x8] sm:$0xff]
  %v502 = vld [vmem:[%s499 + $0x10] sm:$0xff]
  %v503 = vld [vmem:[%s499 + $0x18] sm:$0xff]
  %504 = vmatprep.subr.mxu0 %v496
  %505 = vmatpush1.msra.mxu0 %v495
  %506 = vmatprep.subr.mxu0 %v492
  %507 = vmatpush1.msra.mxu0 %v491
  %508 = vmatprep.subr.mxu0 %v488
  %509 = vmatpush1.msra.mxu0 %v487
  %510 = vmatprep.subr.mxu0 %v484
  %511 = vmatpush1.msra.mxu0 %v483
  %512 = vmatprep.subr.mxu0 %v480
  %513 = vmatpush1.msra.mxu0 %v479
  %514 = vmatprep.subr.mxu0 %v476
  %515 = vmatpush1.msra.mxu0 %v475
  %516 = vmatprep.subr.mxu0 %v472
  %517 = vmatpush1.msra.mxu0 %v471
  %518 = vmatprep.subr.mxu0 %v468
  %519 = vmatpush1.msra.mxu0 %v467
  %520 = vmatprep.subr.mxu0 %v464
  %521 = vmatpush1.msra.mxu0 %v463
  %522 = vmatprep.subr.mxu0 %v460
  %523 = vmatpush1.msra.mxu0 %v459
  %524 = vmatprep.subr.mxu0 %v456
  %525 = vmatpush1.msra.mxu0 %v455
  %526 = vmatprep.subr.mxu0 %v452
  %527 = vmatpush1.msra.mxu0 %v451
  %528 = vmatprep.subr.mxu0 %v448
  %529 = vmatpush1.msra.mxu0 %v447
  %530 = vmatprep.subr.mxu0 %v444
  %531 = vmatpush1.msra.mxu0 %v443
  %532 = vmatprep.subr.mxu0 %v440
  %533 = vmatpush1.msra.mxu0 %v439
  %534 = vmatprep.subr.mxu0 %v436
  %535 = vmatpush1.msra.mxu0 %v435
  %536 = vmatprep.subr.mxu0 0.0
  %537 = vmatpush2.msra.mxu0 0.0
  %538 = vmatprep.subr.mxu0 0.0
  %539 = vmatpush2.msra.mxu0 0.0
  %540 = vmatprep.subr.mxu0 0.0
  %541 = vmatpush2.msra.mxu0 0.0
  %542 = vmatprep.subr.mxu0 0.0
  %543 = vmatpush2.msra.mxu0 0.0
  %544 = vmatprep.subr.mxu0 0.0
  %545 = vmatpush2.msra.mxu0 0.0
  %546 = vmatprep.subr.mxu0 0.0
  %547 = vmatpush2.msra.mxu0 0.0
  %548 = vmatprep.subr.mxu0 0.0
  %549 = vmatpush2.msra.mxu0 0.0
  %550 = vmatprep.subr.mxu0 0.0
  %551 = vmatpush2.msra.mxu0 0.0
  %552 = vmatprep.subr.mxu0 0.0
  %553 = vmatpush2.msra.mxu0 0.0
  %554 = vmatprep.subr.mxu0 0.0
  %555 = vmatpush2.msra.mxu0 0.0
  %556 = vmatprep.subr.mxu0 0.0
  %557 = vmatpush2.msra.mxu0 0.0
  %558 = vmatprep.subr.mxu0 0.0
  %559 = vmatpush2.msra.mxu0 0.0
  %560 = vmatprep.subr.mxu0 0.0
  %561 = vmatpush2.msra.mxu0 0.0
  %562 = vmatprep.subr.mxu0 0.0
  %563 = vmatpush2.msra.mxu0 0.0
  %564 = vmatprep.subr.mxu0 0.0
  %565 = vmatpush2.msra.mxu0 0.0
  %566 = vmatprep.subr.mxu0 0.0
  %567 = vmatpush2.msra.mxu0 0.0
  %568 = vmatprep.mubr.f32.mxu0 0.0
  %569 = vmatmul.mubr.f32.gmra.mxu0 %v346
  %v570 = vpop.f32.mrf.mxu0
  %v571 = vadd.f32 %v500, %v570
  %v572 = vpop.f32.mrf.mxu0
  %v573 = vadd.f32 %v501, %v572
  %574 = vdwg.mxu0
  %575 = vmatprep.subr.mxu0 %v498
  %576 = vmatpush1.msra.mxu0 %v497
  %577 = vmatprep.subr.mxu0 %v494
  %578 = vmatpush1.msra.mxu0 %v493
  %579 = vmatprep.subr.mxu0 %v490
  %580 = vmatpush1.msra.mxu0 %v489
  %581 = vmatprep.subr.mxu0 %v486
  %582 = vmatpush1.msra.mxu0 %v485
  %583 = vmatprep.subr.mxu0 %v482
  %584 = vmatpush1.msra.mxu0 %v481
  %585 = vmatprep.subr.mxu0 %v478
  %586 = vmatpush1.msra.mxu0 %v477
  %587 = vmatprep.subr.mxu0 %v474
  %588 = vmatpush1.msra.mxu0 %v473
  %589 = vmatprep.subr.mxu0 %v470
  %590 = vmatpush1.msra.mxu0 %v469
  %591 = vmatprep.subr.mxu0 %v466
  %592 = vmatpush1.msra.mxu0 %v465
  %593 = vmatprep.subr.mxu0 %v462
  %594 = vmatpush1.msra.mxu0 %v461
  %595 = vmatprep.subr.mxu0 %v458
  %596 = vmatpush1.msra.mxu0 %v457
  %597 = vmatprep.subr.mxu0 %v454
  %598 = vmatpush1.msra.mxu0 %v453
  %599 = vmatprep.subr.mxu0 %v450
  %600 = vmatpush1.msra.mxu0 %v449
  %601 = vmatprep.subr.mxu0 %v446
  %602 = vmatpush1.msra.mxu0 %v445
  %603 = vmatprep.subr.mxu0 %v442
  %604 = vmatpush1.msra.mxu0 %v441
  %605 = vmatprep.subr.mxu0 %v438
  %606 = vmatpush1.msra.mxu0 %v437
  %607 = vmatprep.subr.mxu0 0.0
  %608 = vmatpush2.msra.mxu0 0.0
  %609 = vmatprep.subr.mxu0 0.0
  %610 = vmatpush2.msra.mxu0 0.0
  %611 = vmatprep.subr.mxu0 0.0
  %612 = vmatpush2.msra.mxu0 0.0
  %613 = vmatprep.subr.mxu0 0.0
  %614 = vmatpush2.msra.mxu0 0.0
  %615 = vmatprep.subr.mxu0 0.0
  %616 = vmatpush2.msra.mxu0 0.0
  %617 = vmatprep.subr.mxu0 0.0
  %618 = vmatpush2.msra.mxu0 0.0
  %619 = vmatprep.subr.mxu0 0.0
  %620 = vmatpush2.msra.mxu0 0.0
  %621 = vmatprep.subr.mxu0 0.0
  %622 = vmatpush2.msra.mxu0 0.0
  %623 = vmatprep.subr.mxu0 0.0
  %624 = vmatpush2.msra.mxu0 0.0
  %625 = vmatprep.subr.mxu0 0.0
  %626 = vmatpush2.msra.mxu0 0.0
  %627 = vmatprep.subr.mxu0 0.0
  %628 = vmatpush2.msra.mxu0 0.0
  %629 = vmatprep.subr.mxu0 0.0
  %630 = vmatpush2.msra.mxu0 0.0
  %631 = vmatprep.subr.mxu0 0.0
  %632 = vmatpush2.msra.mxu0 0.0
  %633 = vmatprep.subr.mxu0 0.0
  %634 = vmatpush2.msra.mxu0 0.0
  %635 = vmatprep.subr.mxu0 0.0
  %636 = vmatpush2.msra.mxu0 0.0
  %637 = vmatprep.subr.mxu0 0.0
  %638 = vmatpush2.msra.mxu0 0.0
  %639 = vmatprep.mubr.f32.mxu0 0.0
  %640 = vmatmul.mubr.f32.gmra.mxu0 %v346
  %v641 = vpop.f32.mrf.mxu0
  %v642 = vadd.f32 %v502, %v641
  %v643 = vpop.f32.mrf.mxu0
  %v644 = vadd.f32 %v503, %v643
  %645 = vdwg.mxu0
  %v646 = vtanh.pop %v571
  %v647 = vxor.u32 %v573, 2147483648
  %v648 = vmul.f32 %v647, 1.442695
  %v649 = vpow.pop %v648
  %v650 = vadd.f32 %v649, 1.0
  %v651 = vrcp.pop %v650
  %v652 = vmul.f32 1.0, %v651
  %v653 = vxor.u32 %v642, 2147483648
  %v654 = vmul.f32 %v653, 1.442695
  %v655 = vpow.pop %v654
  %v656 = vadd.f32 %v655, 1.0
  %v657 = vrcp.pop %v656
  %v658 = vmul.f32 1.0, %v657
  %v659 = vxor.u32 %v644, 2147483648
  %v660 = vmul.f32 %v659, 1.442695
  %v661 = vpow.pop %v660
  %v662 = vadd.f32 %v661, 1.0
  %v663 = vrcp.pop %v662
  %v664 = vmul.f32 1.0, %v663
  %v665 = vmul.f32 %v658, %v346
  %v666 = vmul.f32 %v652, %v646
  %v667 = vadd.f32 %v665, %v666
  %v668 = vtanh.pop %v667
  %v669 = vmul.f32 %v664, %v668
  %v670 = vld [vmem:[%s3] sm:$0xff]
  %v671 = vld [vmem:[%s3 + $0x8] sm:$0xff]
  %v672 = vld [vmem:[%s3 + $0x10] sm:$0xff]
  %v673 = vld [vmem:[%s3 + $0x18] sm:$0xff]
  %v674 = vld [vmem:[%s3 + $0x20] sm:$0xff]
  %v675 = vld [vmem:[%s3 + $0x28] sm:$0xff]
  %v676 = vld [vmem:[%s3 + $0x30] sm:$0xff]
  %v677 = vld [vmem:[%s3 + $0x38] sm:$0xff]
  %v678 = vld [vmem:[%s3 + $0x40] sm:$0xff]
  %v679 = vld [vmem:[%s3 + $0x48] sm:$0xff]
  %v680 = vld [vmem:[%s3 + $0x50] sm:$0xff]
  %v681 = vld [vmem:[%s3 + $0x58] sm:$0xff]
  %v682 = vld [vmem:[%s3 + $0x60] sm:$0xff]
  %v683 = vld [vmem:[%s3 + $0x68] sm:$0xff]
  %v684 = vld [vmem:[%s3 + $0x70] sm:$0xff]
  %v685 = vld [vmem:[%s3 + $0x78] sm:$0xff]
  %686 = vmatprep.subr.mxu0 0.0
  %687 = vmatpush1.msra.mxu0 %v685
  %688 = vmatprep.subr.mxu0 0.0
  %689 = vmatpush1.msra.mxu0 %v684
  %690 = vmatprep.subr.mxu0 0.0
  %691 = vmatpush1.msra.mxu0 %v683
  %692 = vmatprep.subr.mxu0 0.0
  %693 = vmatpush1.msra.mxu0 %v682
  %694 = vmatprep.subr.mxu0 0.0
  %695 = vmatpush1.msra.mxu0 %v681
  %696 = vmatprep.subr.mxu0 0.0
  %697 = vmatpush1.msra.mxu0 %v680
  %698 = vmatprep.subr.mxu0 0.0
  %699 = vmatpush1.msra.mxu0 %v679
  %700 = vmatprep.subr.mxu0 0.0
  %701 = vmatpush1.msra.mxu0 %v678
  %702 = vmatprep.subr.mxu0 0.0
  %703 = vmatpush1.msra.mxu0 %v677
  %704 = vmatprep.subr.mxu0 0.0
  %705 = vmatpush1.msra.mxu0 %v676
  %706 = vmatprep.subr.mxu0 0.0
  %707 = vmatpush1.msra.mxu0 %v675
  %708 = vmatprep.subr.mxu0 0.0
  %709 = vmatpush1.msra.mxu0 %v674
  %710 = vmatprep.subr.mxu0 0.0
  %711 = vmatpush1.msra.mxu0 %v673
  %712 = vmatprep.subr.mxu0 0.0
  %713 = vmatpush1.msra.mxu0 %v672
  %714 = vmatprep.subr.mxu0 0.0
  %715 = vmatpush1.msra.mxu0 %v671
  %716 = vmatprep.subr.mxu0 0.0
  %717 = vmatpush1.msra.mxu0 %v670
  %718 = vmatprep.subr.mxu0 0.0
  %719 = vmatpush2.msra.mxu0 0.0
  %720 = vmatprep.subr.mxu0 0.0
  %721 = vmatpush2.msra.mxu0 0.0
  %722 = vmatprep.subr.mxu0 0.0
  %723 = vmatpush2.msra.mxu0 0.0
  %724 = vmatprep.subr.mxu0 0.0
  %725 = vmatpush2.msra.mxu0 0.0
  %726 = vmatprep.subr.mxu0 0.0
  %727 = vmatpush2.msra.mxu0 0.0
  %728 = vmatprep.subr.mxu0 0.0
  %729 = vmatpush2.msra.mxu0 0.0
  %730 = vmatprep.subr.mxu0 0.0
  %731 = vmatpush2.msra.mxu0 0.0
  %732 = vmatprep.subr.mxu0 0.0
  %733 = vmatpush2.msra.mxu0 0.0
  %734 = vmatprep.subr.mxu0 0.0
  %735 = vmatpush2.msra.mxu0 0.0
  %736 = vmatprep.subr.mxu0 0.0
  %737 = vmatpush2.msra.mxu0 0.0
  %738 = vmatprep.subr.mxu0 0.0
  %739 = vmatpush2.msra.mxu0 0.0
  %740 = vmatprep.subr.mxu0 0.0
  %741 = vmatpush2.msra.mxu0 0.0
  %742 = vmatprep.subr.mxu0 0.0
  %743 = vmatpush2.msra.mxu0 0.0
  %744 = vmatprep.subr.mxu0 0.0
  %745 = vmatpush2.msra.mxu0 0.0
  %746 = vmatprep.subr.mxu0 0.0
  %747 = vmatpush2.msra.mxu0 0.0
  %748 = vmatprep.subr.mxu0 0.0
  %749 = vmatpush2.msra.mxu0 0.0
  %750 = vmatprep.mubr.f32.mxu0 0.0
  %751 = vmatmul.mubr.f32.gmra.mxu0 %v669
  %v752 = vpop.f32.mrf.mxu0
  %v753 = vadd.f32 0.0, %v752
  %v754 = vpop.f32.mrf.mxu0
  %755 = vdwg.mxu0
  %s756 = scalar_lea.vmem %s4, 16
  %757 = vst [vmem:[%s756] sm:$0xff] %v753
  %v758 = vld [vmem:[%s2] sm:$0xff]
  %v759 = vld [vmem:[%s2 + $0x8] sm:$0xff]
  %v760 = vld [vmem:[%s2 + $0x10] sm:$0xff]
  %v761 = vld [vmem:[%s2 + $0x18] sm:$0xff]
  %v762 = vld [vmem:[%s2 + $0x20] sm:$0xff]
  %v763 = vld [vmem:[%s2 + $0x28] sm:$0xff]
  %v764 = vld [vmem:[%s2 + $0x30] sm:$0xff]
  %v765 = vld [vmem:[%s2 + $0x38] sm:$0xff]
  %v766 = vld [vmem:[%s2 + $0x40] sm:$0xff]
  %v767 = vld [vmem:[%s2 + $0x48] sm:$0xff]
  %v768 = vld [vmem:[%s2 + $0x50] sm:$0xff]
  %v769 = vld [vmem:[%s2 + $0x58] sm:$0xff]
  %v770 = vld [vmem:[%s2 + $0x60] sm:$0xff]
  %v771 = vld [vmem:[%s2 + $0x68] sm:$0xff]
  %v772 = vld [vmem:[%s2 + $0x70] sm:$0xff]
  %v773 = vld [vmem:[%s2 + $0x78] sm:$0xff]
  %v774 = vld [vmem:[%s2 + $0x80] sm:$0xff]
  %v775 = vld [vmem:[%s2 + $0x88] sm:$0xff]
  %v776 = vld [vmem:[%s2 + $0x90] sm:$0xff]
  %v777 = vld [vmem:[%s2 + $0x98] sm:$0xff]
  %v778 = vld [vmem:[%s2 + $0xa0] sm:$0xff]
  %v779 = vld [vmem:[%s2 + $0xa8] sm:$0xff]
  %v780 = vld [vmem:[%s2 + $0xb0] sm:$0xff]
  %v781 = vld [vmem:[%s2 + $0xb8] sm:$0xff]
  %v782 = vld [vmem:[%s2 + $0xc0] sm:$0xff]
  %v783 = vld [vmem:[%s2 + $0xc8] sm:$0xff]
  %v784 = vld [vmem:[%s2 + $0xd0] sm:$0xff]
  %v785 = vld [vmem:[%s2 + $0xd8] sm:$0xff]
  %v786 = vld [vmem:[%s2 + $0xe0] sm:$0xff]
  %v787 = vld [vmem:[%s2 + $0xe8] sm:$0xff]
  %v788 = vld [vmem:[%s2 + $0xf0] sm:$0xff]
  %v789 = vld [vmem:[%s2 + $0xf8] sm:$0xff]
  %v790 = vld [vmem:[%s2 + $0x100] sm:$0xff]
  %v791 = vld [vmem:[%s2 + $0x108] sm:$0xff]
  %v792 = vld [vmem:[%s2 + $0x110] sm:$0xff]
  %v793 = vld [vmem:[%s2 + $0x118] sm:$0xff]
  %v794 = vld [vmem:[%s2 + $0x120] sm:$0xff]
  %v795 = vld [vmem:[%s2 + $0x128] sm:$0xff]
  %v796 = vld [vmem:[%s2 + $0x130] sm:$0xff]
  %v797 = vld [vmem:[%s2 + $0x138] sm:$0xff]
  %v798 = vld [vmem:[%s2 + $0x140] sm:$0xff]
  %v799 = vld [vmem:[%s2 + $0x148] sm:$0xff]
  %v800 = vld [vmem:[%s2 + $0x150] sm:$0xff]
  %v801 = vld [vmem:[%s2 + $0x158] sm:$0xff]
  %v802 = vld [vmem:[%s2 + $0x160] sm:$0xff]
  %v803 = vld [vmem:[%s2 + $0x168] sm:$0xff]
  %v804 = vld [vmem:[%s2 + $0x170] sm:$0xff]
  %v805 = vld [vmem:[%s2 + $0x178] sm:$0xff]
  %v806 = vld [vmem:[%s2 + $0x180] sm:$0xff]
  %v807 = vld [vmem:[%s2 + $0x188] sm:$0xff]
  %v808 = vld [vmem:[%s2 + $0x190] sm:$0xff]
  %v809 = vld [vmem:[%s2 + $0x198] sm:$0xff]
  %v810 = vld [vmem:[%s2 + $0x1a0] sm:$0xff]
  %v811 = vld [vmem:[%s2 + $0x1a8] sm:$0xff]
  %v812 = vld [vmem:[%s2 + $0x1b0] sm:$0xff]
  %v813 = vld [vmem:[%s2 + $0x1b8] sm:$0xff]
  %v814 = vld [vmem:[%s2 + $0x1c0] sm:$0xff]
  %v815 = vld [vmem:[%s2 + $0x1c8] sm:$0xff]
  %v816 = vld [vmem:[%s2 + $0x1d0] sm:$0xff]
  %v817 = vld [vmem:[%s2 + $0x1d8] sm:$0xff]
  %v818 = vld [vmem:[%s2 + $0x1e0] sm:$0xff]
  %v819 = vld [vmem:[%s2 + $0x1e8] sm:$0xff]
  %v820 = vld [vmem:[%s2 + $0x1f0] sm:$0xff]
  %v821 = vld [vmem:[%s2 + $0x1f8] sm:$0xff]
  %s822 = scalar_lea.vmem %s0, 64
  %v823 = vld [vmem:[%s822] sm:$0xff]
  %v824 = vld [vmem:[%s822 + $0x8] sm:$0xff]
  %v825 = vld [vmem:[%s822 + $0x10] sm:$0xff]
  %v826 = vld [vmem:[%s822 + $0x18] sm:$0xff]
  %827 = vmatprep.subr.mxu0 %v819
  %828 = vmatpush1.msra.mxu0 %v818
  %829 = vmatprep.subr.mxu0 %v815
  %830 = vmatpush1.msra.mxu0 %v814
  %831 = vmatprep.subr.mxu0 %v811
  %832 = vmatpush1.msra.mxu0 %v810
  %833 = vmatprep.subr.mxu0 %v807
  %834 = vmatpush1.msra.mxu0 %v806
  %835 = vmatprep.subr.mxu0 %v803
  %836 = vmatpush1.msra.mxu0 %v802
  %837 = vmatprep.subr.mxu0 %v799
  %838 = vmatpush1.msra.mxu0 %v798
  %839 = vmatprep.subr.mxu0 %v795
  %840 = vmatpush1.msra.mxu0 %v794
  %841 = vmatprep.subr.mxu0 %v791
  %842 = vmatpush1.msra.mxu0 %v790
  %843 = vmatprep.subr.mxu0 %v787
  %844 = vmatpush1.msra.mxu0 %v786
  %845 = vmatprep.subr.mxu0 %v783
  %846 = vmatpush1.msra.mxu0 %v782
  %847 = vmatprep.subr.mxu0 %v779
  %848 = vmatpush1.msra.mxu0 %v778
  %849 = vmatprep.subr.mxu0 %v775
  %850 = vmatpush1.msra.mxu0 %v774
  %851 = vmatprep.subr.mxu0 %v771
  %852 = vmatpush1.msra.mxu0 %v770
  %853 = vmatprep.subr.mxu0 %v767
  %854 = vmatpush1.msra.mxu0 %v766
  %855 = vmatprep.subr.mxu0 %v763
  %856 = vmatpush1.msra.mxu0 %v762
  %857 = vmatprep.subr.mxu0 %v759
  %858 = vmatpush1.msra.mxu0 %v758
  %859 = vmatprep.subr.mxu0 0.0
  %860 = vmatpush2.msra.mxu0 0.0
  %861 = vmatprep.subr.mxu0 0.0
  %862 = vmatpush2.msra.mxu0 0.0
  %863 = vmatprep.subr.mxu0 0.0
  %864 = vmatpush2.msra.mxu0 0.0
  %865 = vmatprep.subr.mxu0 0.0
  %866 = vmatpush2.msra.mxu0 0.0
  %867 = vmatprep.subr.mxu0 0.0
  %868 = vmatpush2.msra.mxu0 0.0
  %869 = vmatprep.subr.mxu0 0.0
  %870 = vmatpush2.msra.mxu0 0.0
  %871 = vmatprep.subr.mxu0 0.0
  %872 = vmatpush2.msra.mxu0 0.0
  %873 = vmatprep.subr.mxu0 0.0
  %874 = vmatpush2.msra.mxu0 0.0
  %875 = vmatprep.subr.mxu0 0.0
  %876 = vmatpush2.msra.mxu0 0.0
  %877 = vmatprep.subr.mxu0 0.0
  %878 = vmatpush2.msra.mxu0 0.0
  %879 = vmatprep.subr.mxu0 0.0
  %880 = vmatpush2.msra.mxu0 0.0
  %881 = vmatprep.subr.mxu0 0.0
  %882 = vmatpush2.msra.mxu0 0.0
  %883 = vmatprep.subr.mxu0 0.0
  %884 = vmatpush2.msra.mxu0 0.0
  %885 = vmatprep.subr.mxu0 0.0
  %886 = vmatpush2.msra.mxu0 0.0
  %887 = vmatprep.subr.mxu0 0.0
  %888 = vmatpush2.msra.mxu0 0.0
  %889 = vmatprep.subr.mxu0 0.0
  %890 = vmatpush2.msra.mxu0 0.0
  %891 = vmatprep.mubr.f32.mxu0 0.0
  %892 = vmatmul.mubr.f32.gmra.mxu0 %v669
  %v893 = vpop.f32.mrf.mxu0
  %v894 = vadd.f32 %v823, %v893
  %v895 = vpop.f32.mrf.mxu0
  %v896 = vadd.f32 %v824, %v895
  %897 = vdwg.mxu0
  %898 = vmatprep.subr.mxu0 %v821
  %899 = vmatpush1.msra.mxu0 %v820
  %900 = vmatprep.subr.mxu0 %v817
  %901 = vmatpush1.msra.mxu0 %v816
  %902 = vmatprep.subr.mxu0 %v813
  %903 = vmatpush1.msra.mxu0 %v812
  %904 = vmatprep.subr.mxu0 %v809
  %905 = vmatpush1.msra.mxu0 %v808
  %906 = vmatprep.subr.mxu0 %v805
  %907 = vmatpush1.msra.mxu0 %v804
  %908 = vmatprep.subr.mxu0 %v801
  %909 = vmatpush1.msra.mxu0 %v800
  %910 = vmatprep.subr.mxu0 %v797
  %911 = vmatpush1.msra.mxu0 %v796
  %912 = vmatprep.subr.mxu0 %v793
  %913 = vmatpush1.msra.mxu0 %v792
  %914 = vmatprep.subr.mxu0 %v789
  %915 = vmatpush1.msra.mxu0 %v788
  %916 = vmatprep.subr.mxu0 %v785
  %917 = vmatpush1.msra.mxu0 %v784
  %918 = vmatprep.subr.mxu0 %v781
  %919 = vmatpush1.msra.mxu0 %v780
  %920 = vmatprep.subr.mxu0 %v777
  %921 = vmatpush1.msra.mxu0 %v776
  %922 = vmatprep.subr.mxu0 %v773
  %923 = vmatpush1.msra.mxu0 %v772
  %924 = vmatprep.subr.mxu0 %v769
  %925 = vmatpush1.msra.mxu0 %v768
  %926 = vmatprep.subr.mxu0 %v765
  %927 = vmatpush1.msra.mxu0 %v764
  %928 = vmatprep.subr.mxu0 %v761
  %929 = vmatpush1.msra.mxu0 %v760
  %930 = vmatprep.subr.mxu0 0.0
  %931 = vmatpush2.msra.mxu0 0.0
  %932 = vmatprep.subr.mxu0 0.0
  %933 = vmatpush2.msra.mxu0 0.0
  %934 = vmatprep.subr.mxu0 0.0
  %935 = vmatpush2.msra.mxu0 0.0
  %936 = vmatprep.subr.mxu0 0.0
  %937 = vmatpush2.msra.mxu0 0.0
  %938 = vmatprep.subr.mxu0 0.0
  %939 = vmatpush2.msra.mxu0 0.0
  %940 = vmatprep.subr.mxu0 0.0
  %941 = vmatpush2.msra.mxu0 0.0
  %942 = vmatprep.subr.mxu0 0.0
  %943 = vmatpush2.msra.mxu0 0.0
  %944 = vmatprep.subr.mxu0 0.0
  %945 = vmatpush2.msra.mxu0 0.0
  %946 = vmatprep.subr.mxu0 0.0
  %947 = vmatpush2.msra.mxu0 0.0
  %948 = vmatprep.subr.mxu0 0.0
  %949 = vmatpush2.msra.mxu0 0.0
  %950 = vmatprep.subr.mxu0 0.0
  %951 = vmatpush2.msra.mxu0 0.0
  %952 = vmatprep.subr.mxu0 0.0
  %953 = vmatpush2.msra.mxu0 0.0
  %954 = vmatprep.subr.mxu0 0.0
  %955 = vmatpush2.msra.mxu0 0.0
  %956 = vmatprep.subr.mxu0 0.0
  %957 = vmatpush2.msra.mxu0 0.0
  %958 = vmatprep.subr.mxu0 0.0
  %959 = vmatpush2.msra.mxu0 0.0
  %960 = vmatprep.subr.mxu0 0.0
  %961 = vmatpush2.msra.mxu0 0.0
  %962 = vmatprep.mubr.f32.mxu0 0.0
  %963 = vmatmul.mubr.f32.gmra.mxu0 %v669
  %v964 = vpop.f32.mrf.mxu0
  %v965 = vadd.f32 %v825, %v964
  %v966 = vpop.f32.mrf.mxu0
  %v967 = vadd.f32 %v826, %v966
  %968 = vdwg.mxu0
  %v969 = vtanh.pop %v894
  %v970 = vxor.u32 %v896, 2147483648
  %v971 = vmul.f32 %v970, 1.442695
  %v972 = vpow.pop %v971
  %v973 = vadd.f32 %v972, 1.0
  %v974 = vrcp.pop %v973
  %v975 = vmul.f32 1.0, %v974
  %v976 = vxor.u32 %v965, 2147483648
  %v977 = vmul.f32 %v976, 1.442695
  %v978 = vpow.pop %v977
  %v979 = vadd.f32 %v978, 1.0
  %v980 = vrcp.pop %v979
  %v981 = vmul.f32 1.0, %v980
  %v982 = vxor.u32 %v967, 2147483648
  %v983 = vmul.f32 %v982, 1.442695
  %v984 = vpow.pop %v983
  %v985 = vadd.f32 %v984, 1.0
  %v986 = vrcp.pop %v985
  %v987 = vmul.f32 1.0, %v986
  %v988 = vmul.f32 %v981, %v669
  %v989 = vmul.f32 %v975, %v969
  %v990 = vadd.f32 %v988, %v989
  %v991 = vtanh.pop %v990
  %v992 = vmul.f32 %v987, %v991
  %v993 = vld [vmem:[%s3] sm:$0xff]
  %v994 = vld [vmem:[%s3 + $0x8] sm:$0xff]
  %v995 = vld [vmem:[%s3 + $0x10] sm:$0xff]
  %v996 = vld [vmem:[%s3 + $0x18] sm:$0xff]
  %v997 = vld [vmem:[%s3 + $0x20] sm:$0xff]
  %v998 = vld [vmem:[%s3 + $0x28] sm:$0xff]
  %v999 = vld [vmem:[%s3 + $0x30] sm:$0xff]
  %v1000 = vld [vmem:[%s3 + $0x38] sm:$0xff]
  %v1001 = vld [vmem:[%s3 + $0x40] sm:$0xff]
  %v1002 = vld [vmem:[%s3 + $0x48] sm:$0xff]
  %v1003 = vld [vmem:[%s3 + $0x50] sm:$0xff]
  %v1004 = vld [vmem:[%s3 + $0x58] sm:$0xff]
  %v1005 = vld [vmem:[%s3 + $0x60] sm:$0xff]
  %v1006 = vld [vmem:[%s3 + $0x68] sm:$0xff]
  %v1007 = vld [vmem:[%s3 + $0x70] sm:$0xff]
  %v1008 = vld [vmem:[%s3 + $0x78] sm:$0xff]
  %1009 = vmatprep.subr.mxu0 0.0
  %1010 = vmatpush1.msra.mxu0 %v1008
  %1011 = vmatprep.subr.mxu0 0.0
  %1012 = vmatpush1.msra.mxu0 %v1007
  %1013 = vmatprep.subr.mxu0 0.0
  %1014 = vmatpush1.msra.mxu0 %v1006
  %1015 = vmatprep.subr.mxu0 0.0
  %1016 = vmatpush1.msra.mxu0 %v1005
  %1017 = vmatprep.subr.mxu0 0.0
  %1018 = vmatpush1.msra.mxu0 %v1004
  %1019 = vmatprep.subr.mxu0 0.0
  %1020 = vmatpush1.msra.mxu0 %v1003
  %1021 = vmatprep.subr.mxu0 0.0
  %1022 = vmatpush1.msra.mxu0 %v1002
  %1023 = vmatprep.subr.mxu0 0.0
  %1024 = vmatpush1.msra.mxu0 %v1001
  %1025 = vmatprep.subr.mxu0 0.0
  %1026 = vmatpush1.msra.mxu0 %v1000
  %1027 = vmatprep.subr.mxu0 0.0
  %1028 = vmatpush1.msra.mxu0 %v999
  %1029 = vmatprep.subr.mxu0 0.0
  %1030 = vmatpush1.msra.mxu0 %v998
  %1031 = vmatprep.subr.mxu0 0.0
  %1032 = vmatpush1.msra.mxu0 %v997
  %1033 = vmatprep.subr.mxu0 0.0
  %1034 = vmatpush1.msra.mxu0 %v996
  %1035 = vmatprep.subr.mxu0 0.0
  %1036 = vmatpush1.msra.mxu0 %v995
  %1037 = vmatprep.subr.mxu0 0.0
  %1038 = vmatpush1.msra.mxu0 %v994
  %1039 = vmatprep.subr.mxu0 0.0
  %1040 = vmatpush1.msra.mxu0 %v993
  %1041 = vmatprep.subr.mxu0 0.0
  %1042 = vmatpush2.msra.mxu0 0.0
  %1043 = vmatprep.subr.mxu0 0.0
  %1044 = vmatpush2.msra.mxu0 0.0
  %1045 = vmatprep.subr.mxu0 0.0
  %1046 = vmatpush2.msra.mxu0 0.0
  %1047 = vmatprep.subr.mxu0 0.0
  %1048 = vmatpush2.msra.mxu0 0.0
  %1049 = vmatprep.subr.mxu0 0.0
  %1050 = vmatpush2.msra.mxu0 0.0
  %1051 = vmatprep.subr.mxu0 0.0
  %1052 = vmatpush2.msra.mxu0 0.0
  %1053 = vmatprep.subr.mxu0 0.0
  %1054 = vmatpush2.msra.mxu0 0.0
  %1055 = vmatprep.subr.mxu0 0.0
  %1056 = vmatpush2.msra.mxu0 0.0
  %1057 = vmatprep.subr.mxu0 0.0
  %1058 = vmatpush2.msra.mxu0 0.0
  %1059 = vmatprep.subr.mxu0 0.0
  %1060 = vmatpush2.msra.mxu0 0.0
  %1061 = vmatprep.subr.mxu0 0.0
  %1062 = vmatpush2.msra.mxu0 0.0
  %1063 = vmatprep.subr.mxu0 0.0
  %1064 = vmatpush2.msra.mxu0 0.0
  %1065 = vmatprep.subr.mxu0 0.0
  %1066 = vmatpush2.msra.mxu0 0.0
  %1067 = vmatprep.subr.mxu0 0.0
  %1068 = vmatpush2.msra.mxu0 0.0
  %1069 = vmatprep.subr.mxu0 0.0
  %1070 = vmatpush2.msra.mxu0 0.0
  %1071 = vmatprep.subr.mxu0 0.0
  %1072 = vmatpush2.msra.mxu0 0.0
  %1073 = vmatprep.mubr.f32.mxu0 0.0
  %1074 = vmatmul.mubr.f32.gmra.mxu0 %v992
  %v1075 = vpop.f32.mrf.mxu0
  %v1076 = vadd.f32 0.0, %v1075
  %v1077 = vpop.f32.mrf.mxu0
  %1078 = vdwg.mxu0
  %s1079 = scalar_lea.vmem %s4, 24
  %1080 = vst [vmem:[%s1079] sm:$0xff] %v1076
  %v1081 = vld [vmem:[%s2] sm:$0xff]
  %v1082 = vld [vmem:[%s2 + $0x8] sm:$0xff]
  %v1083 = vld [vmem:[%s2 + $0x10] sm:$0xff]
  %v1084 = vld [vmem:[%s2 + $0x18] sm:$0xff]
  %v1085 = vld [vmem:[%s2 + $0x20] sm:$0xff]
  %v1086 = vld [vmem:[%s2 + $0x28] sm:$0xff]
  %v1087 = vld [vmem:[%s2 + $0x30] sm:$0xff]
  %v1088 = vld [vmem:[%s2 + $0x38] sm:$0xff]
  %v1089 = vld [vmem:[%s2 + $0x40] sm:$0xff]
  %v1090 = vld [vmem:[%s2 + $0x48] sm:$0xff]
  %v1091 = vld [vmem:[%s2 + $0x50] sm:$0xff]
  %v1092 = vld [vmem:[%s2 + $0x58] sm:$0xff]
  %v1093 = vld [vmem:[%s2 + $0x60] sm:$0xff]
  %v1094 = vld [vmem:[%s2 + $0x68] sm:$0xff]
  %v1095 = vld [vmem:[%s2 + $0x70] sm:$0xff]
  %v1096 = vld [vmem:[%s2 + $0x78] sm:$0xff]
  %v1097 = vld [vmem:[%s2 + $0x80] sm:$0xff]
  %v1098 = vld [vmem:[%s2 + $0x88] sm:$0xff]
  %v1099 = vld [vmem:[%s2 + $0x90] sm:$0xff]
  %v1100 = vld [vmem:[%s2 + $0x98] sm:$0xff]
  %v1101 = vld [vmem:[%s2 + $0xa0] sm:$0xff]
  %v1102 = vld [vmem:[%s2 + $0xa8] sm:$0xff]
  %v1103 = vld [vmem:[%s2 + $0xb0] sm:$0xff]
  %v1104 = vld [vmem:[%s2 + $0xb8] sm:$0xff]
  %v1105 = vld [vmem:[%s2 + $0xc0] sm:$0xff]
  %v1106 = vld [vmem:[%s2 + $0xc8] sm:$0xff]
  %v1107 = vld [vmem:[%s2 + $0xd0] sm:$0xff]
  %v1108 = vld [vmem:[%s2 + $0xd8] sm:$0xff]
  %v1109 = vld [vmem:[%s2 + $0xe0] sm:$0xff]
  %v1110 = vld [vmem:[%s2 + $0xe8] sm:$0xff]
  %v1111 = vld [vmem:[%s2 + $0xf0] sm:$0xff]
  %v1112 = vld [vmem:[%s2 + $0xf8] sm:$0xff]
  %v1113 = vld [vmem:[%s2 + $0x100] sm:$0xff]
  %v1114 = vld [vmem:[%s2 + $0x108] sm:$0xff]
  %v1115 = vld [vmem:[%s2 + $0x110] sm:$0xff]
  %v1116 = vld [vmem:[%s2 + $0x118] sm:$0xff]
  %v1117 = vld [vmem:[%s2 + $0x120] sm:$0xff]
  %v1118 = vld [vmem:[%s2 + $0x128] sm:$0xff]
  %v1119 = vld [vmem:[%s2 + $0x130] sm:$0xff]
  %v1120 = vld [vmem:[%s2 + $0x138] sm:$0xff]
  %v1121 = vld [vmem:[%s2 + $0x140] sm:$0xff]
  %v1122 = vld [vmem:[%s2 + $0x148] sm:$0xff]
  %v1123 = vld [vmem:[%s2 + $0x150] sm:$0xff]
  %v1124 = vld [vmem:[%s2 + $0x158] sm:$0xff]
  %v1125 = vld [vmem:[%s2 + $0x160] sm:$0xff]
  %v1126 = vld [vmem:[%s2 + $0x168] sm:$0xff]
  %v1127 = vld [vmem:[%s2 + $0x170] sm:$0xff]
  %v1128 = vld [vmem:[%s2 + $0x178] sm:$0xff]
  %v1129 = vld [vmem:[%s2 + $0x180] sm:$0xff]
  %v1130 = vld [vmem:[%s2 + $0x188] sm:$0xff]
  %v1131 = vld [vmem:[%s2 + $0x190] sm:$0xff]
  %v1132 = vld [vmem:[%s2 + $0x198] sm:$0xff]
  %v1133 = vld [vmem:[%s2 + $0x1a0] sm:$0xff]
  %v1134 = vld [vmem:[%s2 + $0x1a8] sm:$0xff]
  %v1135 = vld [vmem:[%s2 + $0x1b0] sm:$0xff]
  %v1136 = vld [vmem:[%s2 + $0x1b8] sm:$0xff]
  %v1137 = vld [vmem:[%s2 + $0x1c0] sm:$0xff]
  %v1138 = vld [vmem:[%s2 + $0x1c8] sm:$0xff]
  %v1139 = vld [vmem:[%s2 + $0x1d0] sm:$0xff]
  %v1140 = vld [vmem:[%s2 + $0x1d8] sm:$0xff]
  %v1141 = vld [vmem:[%s2 + $0x1e0] sm:$0xff]
  %v1142 = vld [vmem:[%s2 + $0x1e8] sm:$0xff]
  %v1143 = vld [vmem:[%s2 + $0x1f0] sm:$0xff]
  %v1144 = vld [vmem:[%s2 + $0x1f8] sm:$0xff]
  %s1145 = scalar_lea.vmem %s0, 96
  %v1146 = vld [vmem:[%s1145] sm:$0xff]
  %v1147 = vld [vmem:[%s1145 + $0x8] sm:$0xff]
  %v1148 = vld [vmem:[%s1145 + $0x10] sm:$0xff]
  %v1149 = vld [vmem:[%s1145 + $0x18] sm:$0xff]
  %1150 = vmatprep.subr.mxu0 %v1142
  %1151 = vmatpush1.msra.mxu0 %v1141
  %1152 = vmatprep.subr.mxu0 %v1138
  %1153 = vmatpush1.msra.mxu0 %v1137
  %1154 = vmatprep.subr.mxu0 %v1134
  %1155 = vmatpush1.msra.mxu0 %v1133
  %1156 = vmatprep.subr.mxu0 %v1130
  %1157 = vmatpush1.msra.mxu0 %v1129
  %1158 = vmatprep.subr.mxu0 %v1126
  %1159 = vmatpush1.msra.mxu0 %v1125
  %1160 = vmatprep.subr.mxu0 %v1122
  %1161 = vmatpush1.msra.mxu0 %v1121
  %1162 = vmatprep.subr.mxu0 %v1118
  %1163 = vmatpush1.msra.mxu0 %v1117
  %1164 = vmatprep.subr.mxu0 %v1114
  %1165 = vmatpush1.msra.mxu0 %v1113
  %1166 = vmatprep.subr.mxu0 %v1110
  %1167 = vmatpush1.msra.mxu0 %v1109
  %1168 = vmatprep.subr.mxu0 %v1106
  %1169 = vmatpush1.msra.mxu0 %v1105
  %1170 = vmatprep.subr.mxu0 %v1102
  %1171 = vmatpush1.msra.mxu0 %v1101
  %1172 = vmatprep.subr.mxu0 %v1098
  %1173 = vmatpush1.msra.mxu0 %v1097
  %1174 = vmatprep.subr.mxu0 %v1094
  %1175 = vmatpush1.msra.mxu0 %v1093
  %1176 = vmatprep.subr.mxu0 %v1090
  %1177 = vmatpush1.msra.mxu0 %v1089
  %1178 = vmatprep.subr.mxu0 %v1086
  %1179 = vmatpush1.msra.mxu0 %v1085
  %1180 = vmatprep.subr.mxu0 %v1082
  %1181 = vmatpush1.msra.mxu0 %v1081
  %1182 = vmatprep.subr.mxu0 0.0
  %1183 = vmatpush2.msra.mxu0 0.0
  %1184 = vmatprep.subr.mxu0 0.0
  %1185 = vmatpush2.msra.mxu0 0.0
  %1186 = vmatprep.subr.mxu0 0.0
  %1187 = vmatpush2.msra.mxu0 0.0
  %1188 = vmatprep.subr.mxu0 0.0
  %1189 = vmatpush2.msra.mxu0 0.0
  %1190 = vmatprep.subr.mxu0 0.0
  %1191 = vmatpush2.msra.mxu0 0.0
  %1192 = vmatprep.subr.mxu0 0.0
  %1193 = vmatpush2.msra.mxu0 0.0
  %1194 = vmatprep.subr.mxu0 0.0
  %1195 = vmatpush2.msra.mxu0 0.0
  %1196 = vmatprep.subr.mxu0 0.0
  %1197 = vmatpush2.msra.mxu0 0.0
  %1198 = vmatprep.subr.mxu0 0.0
  %1199 = vmatpush2.msra.mxu0 0.0
  %1200 = vmatprep.subr.mxu0 0.0
  %1201 = vmatpush2.msra.mxu0 0.0
  %1202 = vmatprep.subr.mxu0 0.0
  %1203 = vmatpush2.msra.mxu0 0.0
  %1204 = vmatprep.subr.mxu0 0.0
  %1205 = vmatpush2.msra.mxu0 0.0
  %1206 = vmatprep.subr.mxu0 0.0
  %1207 = vmatpush2.msra.mxu0 0.0
  %1208 = vmatprep.subr.mxu0 0.0
  %1209 = vmatpush2.msra.mxu0 0.0
  %1210 = vmatprep.subr.mxu0 0.0
  %1211 = vmatpush2.msra.mxu0 0.0
  %1212 = vmatprep.subr.mxu0 0.0
  %1213 = vmatpush2.msra.mxu0 0.0
  %1214 = vmatprep.mubr.f32.mxu0 0.0
  %1215 = vmatmul.mubr.f32.gmra.mxu0 %v992
  %v1216 = vpop.f32.mrf.mxu0
  %v1217 = vadd.f32 %v1146, %v1216
  %v1218 = vpop.f32.mrf.mxu0
  %v1219 = vadd.f32 %v1147, %v1218
  %1220 = vdwg.mxu0
  %1221 = vmatprep.subr.mxu0 %v1144
  %1222 = vmatpush1.msra.mxu0 %v1143
  %1223 = vmatprep.subr.mxu0 %v1140
  %1224 = vmatpush1.msra.mxu0 %v1139
  %1225 = vmatprep.subr.mxu0 %v1136
  %1226 = vmatpush1.msra.mxu0 %v1135
  %1227 = vmatprep.subr.mxu0 %v1132
  %1228 = vmatpush1.msra.mxu0 %v1131
  %1229 = vmatprep.subr.mxu0 %v1128
  %1230 = vmatpush1.msra.mxu0 %v1127
  %1231 = vmatprep.subr.mxu0 %v1124
  %1232 = vmatpush1.msra.mxu0 %v1123
  %1233 = vmatprep.subr.mxu0 %v1120
  %1234 = vmatpush1.msra.mxu0 %v1119
  %1235 = vmatprep.subr.mxu0 %v1116
  %1236 = vmatpush1.msra.mxu0 %v1115
  %1237 = vmatprep.subr.mxu0 %v1112
  %1238 = vmatpush1.msra.mxu0 %v1111
  %1239 = vmatprep.subr.mxu0 %v1108
  %1240 = vmatpush1.msra.mxu0 %v1107
  %1241 = vmatprep.subr.mxu0 %v1104
  %1242 = vmatpush1.msra.mxu0 %v1103
  %1243 = vmatprep.subr.mxu0 %v1100
  %1244 = vmatpush1.msra.mxu0 %v1099
  %1245 = vmatprep.subr.mxu0 %v1096
  %1246 = vmatpush1.msra.mxu0 %v1095
  %1247 = vmatprep.subr.mxu0 %v1092
  %1248 = vmatpush1.msra.mxu0 %v1091
  %1249 = vmatprep.subr.mxu0 %v1088
  %1250 = vmatpush1.msra.mxu0 %v1087
  %1251 = vmatprep.subr.mxu0 %v1084
  %1252 = vmatpush1.msra.mxu0 %v1083
  %1253 = vmatprep.subr.mxu0 0.0
  %1254 = vmatpush2.msra.mxu0 0.0
  %1255 = vmatprep.subr.mxu0 0.0
  %1256 = vmatpush2.msra.mxu0 0.0
  %1257 = vmatprep.subr.mxu0 0.0
  %1258 = vmatpush2.msra.mxu0 0.0
  %1259 = vmatprep.subr.mxu0 0.0
  %1260 = vmatpush2.msra.mxu0 0.0
  %1261 = vmatprep.subr.mxu0 0.0
  %1262 = vmatpush2.msra.mxu0 0.0
  %1263 = vmatprep.subr.mxu0 0.0
  %1264 = vmatpush2.msra.mxu0 0.0
  %1265 = vmatprep.subr.mxu0 0.0
  %1266 = vmatpush2.msra.mxu0 0.0
  %1267 = vmatprep.subr.mxu0 0.0
  %1268 = vmatpush2.msra.mxu0 0.0
  %1269 = vmatprep.subr.mxu0 0.0
  %1270 = vmatpush2.msra.mxu0 0.0
  %1271 = vmatprep.subr.mxu0 0.0
  %1272 = vmatpush2.msra.mxu0 0.0
  %1273 = vmatprep.subr.mxu0 0.0
  %1274 = vmatpush2.msra.mxu0 0.0
  %1275 = vmatprep.subr.mxu0 0.0
  %1276 = vmatpush2.msra.mxu0 0.0
  %1277 = vmatprep.subr.mxu0 0.0
  %1278 = vmatpush2.msra.mxu0 0.0
  %1279 = vmatprep.subr.mxu0 0.0
  %1280 = vmatpush2.msra.mxu0 0.0
  %1281 = vmatprep.subr.mxu0 0.0
  %1282 = vmatpush2.msra.mxu0 0.0
  %1283 = vmatprep.subr.mxu0 0.0
  %1284 = vmatpush2.msra.mxu0 0.0
  %1285 = vmatprep.mubr.f32.mxu0 0.0
  %1286 = vmatmul.mubr.f32.gmra.mxu0 %v992
  %v1287 = vpop.f32.mrf.mxu0
  %v1288 = vadd.f32 %v1148, %v1287
  %v1289 = vpop.f32.mrf.mxu0
  %v1290 = vadd.f32 %v1149, %v1289
  %1291 = vdwg.mxu0
  %v1292 = vtanh.pop %v1217
  %v1293 = vxor.u32 %v1219, 2147483648
  %v1294 = vmul.f32 %v1293, 1.442695
  %v1295 = vpow.pop %v1294
  %v1296 = vadd.f32 %v1295, 1.0
  %v1297 = vrcp.pop %v1296
  %v1298 = vmul.f32 1.0, %v1297
  %v1299 = vxor.u32 %v1288, 2147483648
  %v1300 = vmul.f32 %v1299, 1.442695
  %v1301 = vpow.pop %v1300
  %v1302 = vadd.f32 %v1301, 1.0
  %v1303 = vrcp.pop %v1302
  %v1304 = vmul.f32 1.0, %v1303
  %v1305 = vxor.u32 %v1290, 2147483648
  %v1306 = vmul.f32 %v1305, 1.442695
  %v1307 = vpow.pop %v1306
  %v1308 = vadd.f32 %v1307, 1.0
  %v1309 = vrcp.pop %v1308
  %v1310 = vmul.f32 1.0, %v1309
  %v1311 = vmul.f32 %v1304, %v992
  %v1312 = vmul.f32 %v1298, %v1292
  %v1313 = vadd.f32 %v1311, %v1312
  %v1314 = vtanh.pop %v1313
  %v1315 = vmul.f32 %v1310, %v1314
  %1316 = vst [vmem:[#allocation2] sm:$0xff] %v1315
  // Predicated region
  $region22: #{lstm_forward_sequence.4} parent=0 // pred_check
    %p1317 = pneg %p19
  $region23: #{lstm_forward_sequence.4} parent=0 // pred_check_branch
    %1319 = sbr.rel (%p1317) target = $region25
  $region24: #{lstm_forward_sequence.4} parent=0 // pred_region
    %1320 = vst [vmem:[%s5] sm:$0xff] %v1315
  $region25: #{lstm_forward_sequence.4} parent=0 // pred_fallthru
    _
  // Predicated region
  $region26: #{lstm_forward_sequence.4} parent=0 // pred_check
    _
  $region27: #{lstm_forward_sequence.4} parent=0 // pred_check_branch
    %1322 = sbr.rel (0) target = $region29
  $region28: #{lstm_forward_sequence.4} parent=0 // pred_region
    _
  $region29: #{lstm_forward_sequence.4} parent=0 // pred_fallthru
    _
  // Predicated region
  $region30: #{lstm_forward_sequence.4} parent=0 // pred_check
    _
  $region31: #{lstm_forward_sequence.4} parent=0 // pred_check_branch
    %1324 = sbr.rel (0) target = $region33
  $region32: #{lstm_forward_sequence.4} parent=0 // pred_region
    _
  $region33: #{lstm_forward_sequence.4} parent=0 // pred_fallthru
    _
  // Predicated region
  $region34: #{lstm_forward_sequence.4} parent=0 // pred_check
    _
  $region35: #{lstm_forward_sequence.4} parent=0 // pred_check_branch
    %1326 = sbr.rel (0) target = $region37
  $region36: #{lstm_forward_sequence.4} parent=0 // pred_region
    _
  $region37: #{lstm_forward_sequence.4} parent=0 // pred_fallthru
    _
  // Predicated region
  $region38: #{lstm_forward_sequence.4} parent=0 // pred_check
    _
  $region39: #{lstm_forward_sequence.4} parent=0 // pred_check_branch
    %1328 = sbr.rel (0) target = $region41
  $region40: #{lstm_forward_sequence.4} parent=0 // pred_region
    _
  $region41: #{lstm_forward_sequence.4} parent=0 // pred_fallthru
    _

</llo_original>
